<compile_context>
chip_gen: v6e
topology: v6e:2x2x1
jax: 0.10.0
libtpu: 0.0.40
codegen_flags: <defaults>
</compile_context>

<pallas_src>
import functools
import math

import jax
import jax.numpy as jnp
from jax.experimental import pallas as pl
from jax.experimental.pallas import tpu as pltpu


# ---------------------------------------------------------------------------
# Helpers
# ---------------------------------------------------------------------------
def _layernorm(x, gamma, beta, eps=1e-5):
    mean = jnp.mean(x, axis=-1, keepdims=True)
    var = jnp.mean((x - mean) ** 2, axis=-1, keepdims=True)
    return (x - mean) * jax.lax.rsqrt(var + eps) * gamma + beta


def _choose_q_tile(seq_len):
    """Query-row tile size: full sequence when small, else a multiple of 8/128."""
    if seq_len <= 512:
        return seq_len
    for t in (512, 256, 128):
        if seq_len % t == 0:
            return t
    # TODO(synk): for long, oddly-sized S pad to a multiple of 128 and mask
    # instead of falling back to the full sequence (v7x VMEM budget).
    return seq_len


def _const_index_map(ndim):
    return lambda b, t: (0,) * ndim


# ---------------------------------------------------------------------------
# Pallas kernel: one (batch, q-tile) step of the encoder layer.
# ---------------------------------------------------------------------------
def encoder_layer_kernel(
    xq_ref,    # (1, Sq, D) f32   query rows / residual / output rows
    xkv_ref,   # (1, S,  D) bf16  full sequence (keys / values input)
    wq_ref,    # (H, D, hd) bf16  per-head W_q^T slices, 1/sqrt(hd) folded in
    bq_ref,    # (H, 1, hd) f32   b_q, scale folded in
    wk_ref,    # (H, D, hd) bf16
    bk_ref,    # (H, 1, hd) f32
    wv_ref,    # (H, D, hd) bf16
    bv_ref,    # (H, 1, hd) f32
    wo_ref,    # (H, hd, D) bf16  per-head rows of W_o^T
    bo_ref,    # (1, D) f32
    g1_ref,    # (1, D) f32       LayerNorm-1 gamma
    be1_ref,   # (1, D) f32       LayerNorm-1 beta
    w1_ref,    # (D, F) bf16      FFN W1^T
    b1_ref,    # (1, F) f32
    w2_ref,    # (F, D) bf16      FFN W2^T
    b2_ref,    # (1, D) f32
    g2_ref,    # (1, D) f32       LayerNorm-2 gamma
    be2_ref,   # (1, D) f32       LayerNorm-2 beta
    o_ref,     # (1, Sq, D) f32
    k_scr,     # VMEM scratch (H, S, hd) bf16 — persistent per-batch K heads
    v_scr,     # VMEM scratch (H, S, hd) bf16 — persistent per-batch V heads
    *,
    num_heads: int,
):
    f32 = jnp.float32
    bf16 = jnp.bfloat16

    xq = xq_ref[0]                                    # (Sq, D) f32
    Sq, D = xq.shape
    nh = num_heads

    # --- K/V projection once per batch element; persists across q-tiles ------
    @pl.when(pl.program_id(1) == 0)
    def _():
        xkv = xkv_ref[0]                              # (S, D) bf16
        S = xkv.shape[0]
        xkv_b = jnp.broadcast_to(xkv[None], (nh, S, D))
        k = jnp.einsum('hsd,hde->hse', xkv_b, wk_ref[...],
                       preferred_element_type=f32) + bk_ref[...]
        v = jnp.einsum('hsd,hde->hse', xkv_b, wv_ref[...],
                       preferred_element_type=f32) + bv_ref[...]
        k_scr[...] = k.astype(bf16)
        v_scr[...] = v.astype(bf16)

    # --- Q projection for this q-tile (scale already folded into wq/bq) ------
    xq_b = jnp.broadcast_to(xq.astype(bf16)[None], (nh, Sq, D))
    q = jnp.einsum('hsd,hde->hse', xq_b, wq_ref[...],
                   preferred_element_type=f32) + bq_ref[...]       # (H, Sq, hd)

    # --- head-batched attention (softmax in f32) ------------------------------
    s = jnp.einsum('hqe,hke->hqk', q.astype(bf16), k_scr[...],
                   preferred_element_type=f32)                     # (H, Sq, S)
    s = s - jnp.max(s, axis=-1, keepdims=True)
    p = jnp.exp(s)
    p = p * pl.reciprocal(jnp.sum(p, axis=-1, keepdims=True), approx=True)
    ctx = jnp.einsum('hqk,hke->hqe', p.astype(bf16), v_scr[...],
                     preferred_element_type=f32)                   # (H, Sq, hd)

    # per-head out-projection summed over heads  ==  concat(heads) @ W_o^T
    attn = jnp.sum(
        jnp.einsum('hqe,hed->hqd', ctx.astype(bf16), wo_ref[...],
                   preferred_element_type=f32),
        axis=0) + bo_ref[...]                                      # (Sq, D)

    # residual + LayerNorm-1 (f32)
    y = _layernorm(xq + attn, g1_ref[...], be1_ref[...])

    # --- FFN: Linear -> ReLU -> Linear -> Dropout (identity in eval mode) ----
    # TODO(synk): nn.Dropout(0.1) treated as identity (eval mode); training-mode
    # parity would need pltpu.prng_seed / prng_random_bits masking.
    h1 = jnp.dot(y.astype(bf16), w1_ref[...],
                 preferred_element_type=f32) + b1_ref[...]
    h1 = jnp.maximum(h1, 0.0).astype(bf16)            # ReLU fused with downcast
    f = jnp.dot(h1, w2_ref[...],
                preferred_element_type=f32) + b2_ref[...]

    # residual + LayerNorm-2 (f32)
    o_ref[0] = _layernorm(y + f, g2_ref[...], be2_ref[...])


# ---------------------------------------------------------------------------
# Parameter preprocessing (one-time, outside the kernel)
# ---------------------------------------------------------------------------
def prepare_params(params, num_heads):
    D = params["w_o"].shape[0]
    nh = num_heads
    hd = D // nh
    scale = 1.0 / math.sqrt(hd)

    w_in = params["w_in"].astype(jnp.float32)            # (3D, D)
    b_in = params["b_in"].astype(jnp.float32)            # (3D,)

    def head_split_wt(w, s=1.0):
        # PyTorch Linear weight (D_out, D_in) -> W^T (D_in, D_out), then split
        # the output features by head: (H, D_in, hd).
        return (w.T * s).reshape(D, nh, hd).transpose(1, 0, 2)

    wq_h = head_split_wt(w_in[:D], scale).astype(jnp.bfloat16)
    wk_h = head_split_wt(w_in[D:2 * D]).astype(jnp.bfloat16)
    wv_h = head_split_wt(w_in[2 * D:]).astype(jnp.bfloat16)
    bq_h = (b_in[:D] * scale).reshape(nh, 1, hd)
    bk_h = b_in[D:2 * D].reshape(nh, 1, hd)
    bv_h = b_in[2 * D:].reshape(nh, 1, hd)

    # W_o^T rows split by (input) head: (H, hd, D)
    wo_h = params["w_o"].T.reshape(nh, hd, D).astype(jnp.bfloat16)
    bo = params["b_o"].reshape(1, D).astype(jnp.float32)

    g1 = params["ln1_g"].reshape(1, D).astype(jnp.float32)
    be1 = params["ln1_b"].reshape(1, D).astype(jnp.float32)

    w1_t = params["w1"].T.astype(jnp.bfloat16)            # (D, F)
    b1 = params["b1"].reshape(1, -1).astype(jnp.float32)
    w2_t = params["w2"].T.astype(jnp.bfloat16)             # (F, D)
    b2 = params["b2"].reshape(1, D).astype(jnp.float32)

    g2 = params["ln2_g"].reshape(1, D).astype(jnp.float32)
    be2 = params["ln2_b"].reshape(1, D).astype(jnp.float32)

    return [wq_h, bq_h, wk_h, bk_h, wv_h, bv_h, wo_h, bo,
            g1, be1, w1_t, b1, w2_t, b2, g2, be2]


# ---------------------------------------------------------------------------
# VMEM limit: chip-aware, leaves compiler headroom.
# ---------------------------------------------------------------------------
def _vmem_limit_bytes(S, tS, D, F, nh, plist):
    try:
        cap = int(pltpu.get_tpu_info().vmem_capacity_bytes)
    except Exception:
        cap = 64 * 1024 * 1024
    f32b, bf16b = 4, 2
    pipe = (2 * tS * D * f32b          # xq tiles (double-buffered)
            + 2 * S * D * bf16b        # xkv slab (double-buffered)
            + 2 * tS * D * f32b)       # output tiles (double-buffered)
    weights = sum(int(p.size) * p.dtype.itemsize for p in plist)  # Buffered(1)
    scratch = 2 * S * D * bf16b        # persistent bf16 K/V head scratch
    temps = (tS * D * f32b             # q
             + 2 * nh * tS * S * f32b  # scores + probs
             + tS * D * f32b           # ctx
             + nh * tS * D * f32b      # per-head out-proj before head-sum
             + 2 * tS * D * f32b       # residual / y / f
             + tS * F * (f32b + bf16b))
    est = int(1.5 * (pipe + weights + scratch + temps)) + (4 << 20)
    # Headroom for compiler internal scratch: ~56 MiB on 64 MiB parts (v7x),
    # up to ~112 MiB on 128 MiB parts (v5e/v6e).
    hard_cap = cap - max(cap // 8, 8 * 1024 * 1024)
    return int(min(max(est, 32 * 1024 * 1024), hard_cap))


# ---------------------------------------------------------------------------
# Wrapper: layout + pallas_call
# ---------------------------------------------------------------------------
def encoder_layer(x_lne, params, *, num_heads):
    """x_lne: (seq, batch, d_model), as in PyTorch nn.MultiheadAttention."""
    S, N, D = x_lne.shape
    assert D % num_heads == 0
    hd = D // num_heads
    F = params["w1"].shape[0]

    # (L,N,E) -> (N,L,E); the K/V copy's f32->bf16 cast is fused with the
    # transpose so only one narrow HBM copy is written for it.
    x_q = jnp.transpose(x_lne, (1, 0, 2)).astype(jnp.float32)
    x_kv = jnp.transpose(x_lne, (1, 0, 2)).astype(jnp.bfloat16)

    plist = prepare_params(params, num_heads)

    tS = _choose_q_tile(S)
    n_qt = S // tS

    # Constant-index resident params: single-buffered (no pipelining needed).
    def const_spec(a):
        return pl.BlockSpec(a.shape, _const_index_map(a.ndim),
                            pipeline_mode=pl.Buffered(1))

    flops = int(2 * N * S * D * (4 * D + 2 * S + 2 * F))
    transcendentals = int(N * num_heads * S * S)
    wbytes = sum(int(p.size) * p.dtype.itemsize for p in plist)
    # x read (f32 + bf16 copies) + output write + weights once.
    bytes_accessed = int(N * S * D * (4 + 2 + 4) + wbytes)

    out_nld = pl.pallas_call(
        functools.partial(encoder_layer_kernel, num_heads=num_heads),
        out_shape=jax.ShapeDtypeStruct((N, S, D), jnp.float32),
        grid_spec=pltpu.PrefetchScalarGridSpec(
            num_scalar_prefetch=0,
            grid=(N, n_qt),
            in_specs=[
                # query / residual / output rows of this q-tile
                pl.BlockSpec((1, tS, D), lambda b, t: (b, t, 0)),
                # full sequence for keys/values of this batch element (same
                # block index across t -> fetched once per batch element)
                pl.BlockSpec((1, S, D), lambda b, t: (b, 0, 0)),
            ] + [const_spec(p) for p in plist],
            out_specs=pl.BlockSpec((1, tS, D), lambda b, t: (b, t, 0)),
            scratch_shapes=[
                pltpu.VMEM((num_heads, S, hd), jnp.bfloat16),   # K heads
                pltpu.VMEM((num_heads, S, hd), jnp.bfloat16),   # V heads
            ]),
        compiler_params=pltpu.CompilerParams(
            # q-tile axis MUST be 'arbitrary': the persistent K/V scratch is
            # filled at t==0 and reused for t>0. Batch stays 'parallel'
            # (N>=2 keeps both v7x TensorCores busy).
            dimension_semantics=("parallel", "arbitrary"),
            vmem_limit_bytes=_vmem_limit_bytes(S, tS, D, F, num_heads, plist)),
        cost_estimate=pl.CostEstimate(
            flops=flops, transcendentals=transcendentals,
            bytes_accessed=bytes_accessed),
    )(x_q, x_kv, *plist)

    return jnp.transpose(out_nld, (1, 0, 2))                      # (S, N, D)


# ---------------------------------------------------------------------------
# Pure-JAX f32 reference (matches PyTorch EncoderLayer forward, eval mode)
# ---------------------------------------------------------------------------
def encoder_layer_reference(x_lne, params, *, num_heads):
    S, N, D = x_lne.shape
    hd = D // num_heads
    scale = 1.0 / math.sqrt(hd)
    x = jnp.transpose(x_lne, (1, 0, 2)).astype(jnp.float32)       # (N, S, D)

    qkv = jnp.einsum('nsd,ed->nse', x, params["w_in"]) + params["b_in"]
    q, k, v = qkv[..., :D], qkv[..., D:2 * D], qkv[..., 2 * D:]
    q = q * scale
    qh = q.reshape(N, S, num_heads, hd).transpose(0, 2, 1, 3)
    kh = k.reshape(N, S, num_heads, hd).transpose(0, 2, 1, 3)
    vh = v.reshape(N, S, num_heads, hd).transpose(0, 2, 1, 3)
    s = jnp.einsum('nhqd,nhkd->nhqk', qh, kh)
    p = jax.nn.softmax(s, axis=-1)
    o = jnp.einsum('nhqk,nhkd->nhqd', p, vh)
    o = o.transpose(0, 2, 1, 3).reshape(N, S, D)
    attn = jnp.einsum('nsd,ed->nse', o, params["w_o"]) + params["b_o"]

    y = _layernorm(x + attn, params["ln1_g"], params["ln1_b"])
    h1 = jax.nn.relu(jnp.einsum('nsd,fd->nsf', y, params["w1"]) + params["b1"])
    f = jnp.einsum('nsf,df->nsd', h1, params["w2"]) + params["b2"]
    out = _layernorm(y + f, params["ln2_g"], params["ln2_b"])
    return jnp.transpose(out, (1, 0, 2))


# ---------------------------------------------------------------------------
# Deterministic parameter init (shapes dictated by the PyTorch module)
# ---------------------------------------------------------------------------
def init_params(key, d_model, num_heads, dff):
    ks = jax.random.split(key, 6)
    s = 0.1
    return {
        # nn.MultiheadAttention(d_model, num_heads)
        "w_in": s * jax.random.normal(ks[0], (3 * d_model, d_model), jnp.float32),
        "b_in": s * jax.random.normal(ks[1], (3 * d_model,), jnp.float32),
        "w_o":  s * jax.random.normal(ks[2], (d_model, d_model), jnp.float32),
        "b_o":  s * jax.random.normal(ks[3], (d_model,), jnp.float32),
        # LayerNorm(d_model) after attention
        "ln1_g": jnp.ones((d_model,), jnp.float32),
        "ln1_b": jnp.zeros((d_model,), jnp.float32),
        # FeedForward: Linear(d_model, dff) -> ReLU -> Linear(dff, d_model)
        "w1": s * jax.random.normal(ks[4], (dff, d_model), jnp.float32),
        "b1": jnp.zeros((dff,), jnp.float32),
        "w2": s * jax.random.normal(ks[5], (d_model, dff), jnp.float32),
        "b2": jnp.zeros((d_model,), jnp.float32),
        # LayerNorm(d_model) after FFN
        "ln2_g": jnp.ones((d_model,), jnp.float32),
        "ln2_b": jnp.zeros((d_model,), jnp.float32),
    }


if __name__ == "__main__":
    d_model, num_heads, dff = 4, 2, 4
    seq, batch = 8, 2

    key = jax.random.PRNGKey(0)
    kx, kp = jax.random.split(key)
    x = jax.random.normal(kx, (seq, batch, d_model), jnp.float32)  # (L, N, E)
    params = init_params(kp, d_model, num_heads, dff)

    out = encoder_layer(x, params, num_heads=num_heads)
    out = jax.block_until_ready(out)

    assert out.shape == (seq, batch, d_model)
    assert bool(jnp.all(jnp.isfinite(out)))

    # bf16 matmul operands + approx reciprocal => relaxed tolerance vs f32 ref
    ref = encoder_layer_reference(x, params, num_heads=num_heads)
    max_err = float(jnp.max(jnp.abs(out - ref)))
    assert max_err < 0.1, f"max abs err {max_err}"

    print("KERNEL_OK")
</pallas_src>

<mosaic_0001>
module attributes {stable_mosaic.version = 11 : i64} {
  func.func @encoder_layer_kernel(%arg0: i32, %arg1: i32, %arg2: memref<1x8x4xf32, #tpu.memory_space<vmem>>, %arg3: memref<1x8x4xbf16, #tpu.memory_space<vmem>>, %arg4: memref<2x4x2xbf16, #tpu.memory_space<vmem>>, %arg5: memref<2x1x2xf32, #tpu.memory_space<vmem>>, %arg6: memref<2x4x2xbf16, #tpu.memory_space<vmem>>, %arg7: memref<2x1x2xf32, #tpu.memory_space<vmem>>, %arg8: memref<2x4x2xbf16, #tpu.memory_space<vmem>>, %arg9: memref<2x1x2xf32, #tpu.memory_space<vmem>>, %arg10: memref<2x2x4xbf16, #tpu.memory_space<vmem>>, %arg11: memref<1x4xf32, #tpu.memory_space<vmem>>, %arg12: memref<1x4xf32, #tpu.memory_space<vmem>>, %arg13: memref<1x4xf32, #tpu.memory_space<vmem>>, %arg14: memref<4x4xbf16, #tpu.memory_space<vmem>>, %arg15: memref<1x4xf32, #tpu.memory_space<vmem>>, %arg16: memref<4x4xbf16, #tpu.memory_space<vmem>>, %arg17: memref<1x4xf32, #tpu.memory_space<vmem>>, %arg18: memref<1x4xf32, #tpu.memory_space<vmem>>, %arg19: memref<1x4xf32, #tpu.memory_space<vmem>>, %arg20: memref<1x8x4xf32, #tpu.memory_space<vmem>>, %arg21: memref<2x8x2xbf16, #tpu.memory_space<vmem>>, %arg22: memref<2x8x2xbf16, #tpu.memory_space<vmem>>) attributes {dimension_semantics = [#tpu.dimension_semantics<parallel>, #tpu.dimension_semantics<arbitrary>], iteration_bounds = array<i64: 2, 1>, scalar_prefetch = 0 : i64, scratch_operands = 2 : i64, tpu.core_type = #tpu.core_type<tc>, window_params = [{transform_indices = @transform_0, window_bounds = array<i64: 1, 8, 4>}, {transform_indices = @transform_1, window_bounds = array<i64: 1, 8, 4>}, {pipeline_mode = #tpu.pipeline_mode<synchronous>, transform_indices = @transform_2, window_bounds = array<i64: 2, 4, 2>}, {pipeline_mode = #tpu.pipeline_mode<synchronous>, transform_indices = @transform_3, window_bounds = array<i64: 2, 1, 2>}, {pipeline_mode = #tpu.pipeline_mode<synchronous>, transform_indices = @transform_4, window_bounds = array<i64: 2, 4, 2>}, {pipeline_mode = #tpu.pipeline_mode<synchronous>, transform_indices = @transform_5, window_bounds = array<i64: 2, 1, 2>}, {pipeline_mode = #tpu.pipeline_mode<synchronous>, transform_indices = @transform_6, window_bounds = array<i64: 2, 4, 2>}, {pipeline_mode = #tpu.pipeline_mode<synchronous>, transform_indices = @transform_7, window_bounds = array<i64: 2, 1, 2>}, {pipeline_mode = #tpu.pipeline_mode<synchronous>, transform_indices = @transform_8, window_bounds = array<i64: 2, 2, 4>}, {pipeline_mode = #tpu.pipeline_mode<synchronous>, transform_indices = @transform_9, window_bounds = array<i64: 1, 4>}, {pipeline_mode = #tpu.pipeline_mode<synchronous>, transform_indices = @transform_10, window_bounds = array<i64: 1, 4>}, {pipeline_mode = #tpu.pipeline_mode<synchronous>, transform_indices = @transform_11, window_bounds = array<i64: 1, 4>}, {pipeline_mode = #tpu.pipeline_mode<synchronous>, transform_indices = @transform_12, window_bounds = array<i64: 4, 4>}, {pipeline_mode = #tpu.pipeline_mode<synchronous>, transform_indices = @transform_13, window_bounds = array<i64: 1, 4>}, {pipeline_mode = #tpu.pipeline_mode<synchronous>, transform_indices = @transform_14, window_bounds = array<i64: 4, 4>}, {pipeline_mode = #tpu.pipeline_mode<synchronous>, transform_indices = @transform_15, window_bounds = array<i64: 1, 4>}, {pipeline_mode = #tpu.pipeline_mode<synchronous>, transform_indices = @transform_16, window_bounds = array<i64: 1, 4>}, {pipeline_mode = #tpu.pipeline_mode<synchronous>, transform_indices = @transform_17, window_bounds = array<i64: 1, 4>}, {transform_indices = @transform_18, window_bounds = array<i64: 1, 8, 4>}]} {
    %c0 = arith.constant 0 : index
    %c0_0 = arith.constant 0 : index
    %c0_1 = arith.constant 0 : index
    %0 = vector.load %arg2[%c0, %c0_0, %c0_1] : memref<1x8x4xf32, #tpu.memory_space<vmem>>, vector<1x8x4xf32>
    %1 = vector.shape_cast %0 : vector<1x8x4xf32> to vector<8x4xf32>
    %c0_i32 = arith.constant 0 : i32
    %2 = arith.cmpi eq, %arg1, %c0_i32 : i32
    %3 = arith.extui %2 : i1 to i32
    %c0_i32_2 = arith.constant 0 : i32
    %4 = arith.cmpi ne, %3, %c0_i32_2 : i32
    scf.if %4 {
      %c0_58 = arith.constant 0 : index
      %c0_59 = arith.constant 0 : index
      %c0_60 = arith.constant 0 : index
      %104 = vector.load %arg3[%c0_58, %c0_59, %c0_60] : memref<1x8x4xbf16, #tpu.memory_space<vmem>>, vector<1x8x4xbf16>
      %105 = vector.shape_cast %104 : vector<1x8x4xbf16> to vector<8x4xbf16>
      %106 = vector.shape_cast %105 : vector<8x4xbf16> to vector<1x8x4xbf16>
      %107 = vector.shape_cast %106 : vector<1x8x4xbf16> to vector<1x8x4xbf16>
      %108 = vector.broadcast %107 : vector<1x8x4xbf16> to vector<2x8x4xbf16>
      %c0_61 = arith.constant 0 : index
      %c0_62 = arith.constant 0 : index
      %c0_63 = arith.constant 0 : index
      %109 = vector.load %arg6[%c0_61, %c0_62, %c0_63] : memref<2x4x2xbf16, #tpu.memory_space<vmem>>, vector<2x4x2xbf16>
      "tpu.trace_start"() <{level = 10 : i32, message = "hsd,hde->hse"}> : () -> ()
      %cst_64 = arith.constant dense<0.000000e+00> : vector<2x8x2xf32>
      %110 = tpu.matmul %108, %109, %cst_64 {dimension_numbers = #tpu.dot_dimension_numbers<[2], [1], [1], [2], [0, 0, 0, 1, 1, 2], [0], [0]>} : vector<2x8x4xbf16>, vector<2x4x2xbf16>, vector<2x8x2xf32> -> vector<2x8x2xf32>
      "tpu.trace_stop"() : () -> ()
      %c0_65 = arith.constant 0 : index
      %c0_66 = arith.constant 0 : index
      %c0_67 = arith.constant 0 : index
      %111 = vector.load %arg7[%c0_65, %c0_66, %c0_67] : memref<2x1x2xf32, #tpu.memory_space<vmem>>, vector<2x1x2xf32>
      %112 = vector.broadcast %111 : vector<2x1x2xf32> to vector<2x8x2xf32>
      %113 = arith.addf %110, %112 : vector<2x8x2xf32>
      %c0_68 = arith.constant 0 : index
      %c0_69 = arith.constant 0 : index
      %c0_70 = arith.constant 0 : index
      %114 = vector.load %arg8[%c0_68, %c0_69, %c0_70] : memref<2x4x2xbf16, #tpu.memory_space<vmem>>, vector<2x4x2xbf16>
      "tpu.trace_start"() <{level = 10 : i32, message = "hsd,hde->hse"}> : () -> ()
      %cst_71 = arith.constant dense<0.000000e+00> : vector<2x8x2xf32>
      %115 = tpu.matmul %108, %114, %cst_71 {dimension_numbers = #tpu.dot_dimension_numbers<[2], [1], [1], [2], [0, 0, 0, 1, 1, 2], [0], [0]>} : vector<2x8x4xbf16>, vector<2x4x2xbf16>, vector<2x8x2xf32> -> vector<2x8x2xf32>
      "tpu.trace_stop"() : () -> ()
      %c0_72 = arith.constant 0 : index
      %c0_73 = arith.constant 0 : index
      %c0_74 = arith.constant 0 : index
      %116 = vector.load %arg9[%c0_72, %c0_73, %c0_74] : memref<2x1x2xf32, #tpu.memory_space<vmem>>, vector<2x1x2xf32>
      %117 = vector.broadcast %116 : vector<2x1x2xf32> to vector<2x8x2xf32>
      %118 = arith.addf %115, %117 : vector<2x8x2xf32>
      %119 = arith.truncf %113 : vector<2x8x2xf32> to vector<2x8x2xbf16>
      %c0_75 = arith.constant 0 : index
      %c0_76 = arith.constant 0 : index
      %c0_77 = arith.constant 0 : index
      %120 = vector.load %arg21[%c0_75, %c0_76, %c0_77] : memref<2x8x2xbf16, #tpu.memory_space<vmem>>, vector<2x8x2xbf16>
      tpu.vector_store %arg21[%c0_75, %c0_76, %c0_77], %119 {strides = array<i32>} : memref<2x8x2xbf16, #tpu.memory_space<vmem>>, vector<2x8x2xbf16>,
      %121 = arith.truncf %118 : vector<2x8x2xf32> to vector<2x8x2xbf16>
      %c0_78 = arith.constant 0 : index
      %c0_79 = arith.constant 0 : index
      %c0_80 = arith.constant 0 : index
      %122 = vector.load %arg22[%c0_78, %c0_79, %c0_80] : memref<2x8x2xbf16, #tpu.memory_space<vmem>>, vector<2x8x2xbf16>
      tpu.vector_store %arg22[%c0_78, %c0_79, %c0_80], %121 {strides = array<i32>} : memref<2x8x2xbf16, #tpu.memory_space<vmem>>, vector<2x8x2xbf16>,
    } else {
    }
    %5 = arith.truncf %1 : vector<8x4xf32> to vector<8x4xbf16>
    %6 = vector.shape_cast %5 : vector<8x4xbf16> to vector<1x8x4xbf16>
    %7 = vector.shape_cast %6 : vector<1x8x4xbf16> to vector<1x8x4xbf16>
    %8 = vector.broadcast %7 : vector<1x8x4xbf16> to vector<2x8x4xbf16>
    %c0_3 = arith.constant 0 : index
    %c0_4 = arith.constant 0 : index
    %c0_5 = arith.constant 0 : index
    %9 = vector.load %arg4[%c0_3, %c0_4, %c0_5] : memref<2x4x2xbf16, #tpu.memory_space<vmem>>, vector<2x4x2xbf16>
    "tpu.trace_start"() <{level = 10 : i32, message = "hsd,hde->hse"}> : () -> ()
    %cst = arith.constant dense<0.000000e+00> : vector<2x8x2xf32>
    %10 = tpu.matmul %8, %9, %cst {dimension_numbers = #tpu.dot_dimension_numbers<[2], [1], [1], [2], [0, 0, 0, 1, 1, 2], [0], [0]>} : vector<2x8x4xbf16>, vector<2x4x2xbf16>, vector<2x8x2xf32> -> vector<2x8x2xf32>
    "tpu.trace_stop"() : () -> ()
    %c0_6 = arith.constant 0 : index
    %c0_7 = arith.constant 0 : index
    %c0_8 = arith.constant 0 : index
    %11 = vector.load %arg5[%c0_6, %c0_7, %c0_8] : memref<2x1x2xf32, #tpu.memory_space<vmem>>, vector<2x1x2xf32>
    %12 = vector.broadcast %11 : vector<2x1x2xf32> to vector<2x8x2xf32>
    %13 = arith.addf %10, %12 : vector<2x8x2xf32>
    %14 = arith.truncf %13 : vector<2x8x2xf32> to vector<2x8x2xbf16>
    %c0_9 = arith.constant 0 : index
    %c0_10 = arith.constant 0 : index
    %c0_11 = arith.constant 0 : index
    %15 = vector.load %arg21[%c0_9, %c0_10, %c0_11] : memref<2x8x2xbf16, #tpu.memory_space<vmem>>, vector<2x8x2xbf16>
    "tpu.trace_start"() <{level = 10 : i32, message = "hqe,hke->hqk"}> : () -> ()
    %cst_12 = arith.constant dense<0.000000e+00> : vector<2x8x8xf32>
    %16 = tpu.matmul %14, %15, %cst_12 {dimension_numbers = #tpu.dot_dimension_numbers<[2], [2], [1], [1], [0, 0, 0, 1, 1, 1], [0], [0]>} : vector<2x8x2xbf16>, vector<2x8x2xbf16>, vector<2x8x8xf32> -> vector<2x8x8xf32>
    "tpu.trace_stop"() : () -> ()
    %cst_13 = arith.constant dense<0xFF800000> : vector<2x8xf32>
    %17 = vector.multi_reduction <maximumf>, %16, %cst_13 [2] : vector<2x8x8xf32> to vector<2x8xf32>
    %18 = vector.shape_cast %17 : vector<2x8xf32> to vector<2x8x1xf32>
    %19 = vector.broadcast %18 : vector<2x8x1xf32> to vector<2x8x8xf32>
    %20 = arith.subf %16, %19 : vector<2x8x8xf32>
    %21 = math.exp %20 : vector<2x8x8xf32>
    %cst_14 = arith.constant dense<0.000000e+00> : vector<2x8xf32>
    %22 = vector.multi_reduction <add>, %21, %cst_14 [2] : vector<2x8x8xf32> to vector<2x8xf32>
    %23 = vector.shape_cast %22 : vector<2x8xf32> to vector<2x8x1xf32>
    %24 = tpu.reciprocal %23 {approx = true} : vector<2x8x1xf32> -> vector<2x8x1xf32>
    %25 = vector.broadcast %24 : vector<2x8x1xf32> to vector<2x8x8xf32>
    %26 = arith.mulf %21, %25 : vector<2x8x8xf32>
    %27 = arith.truncf %26 : vector<2x8x8xf32> to vector<2x8x8xbf16>
    %c0_15 = arith.constant 0 : index
    %c0_16 = arith.constant 0 : index
    %c0_17 = arith.constant 0 : index
    %28 = vector.load %arg22[%c0_15, %c0_16, %c0_17] : memref<2x8x2xbf16, #tpu.memory_space<vmem>>, vector<2x8x2xbf16>
    "tpu.trace_start"() <{level = 10 : i32, message = "hqk,hke->hqe"}> : () -> ()
    %cst_18 = arith.constant dense<0.000000e+00> : vector<2x8x2xf32>
    %29 = tpu.matmul %27, %28, %cst_18 {dimension_numbers = #tpu.dot_dimension_numbers<[2], [1], [1], [2], [0, 0, 0, 1, 1, 2], [0], [0]>} : vector<2x8x8xbf16>, vector<2x8x2xbf16>, vector<2x8x2xf32> -> vector<2x8x2xf32>
    "tpu.trace_stop"() : () -> ()
    %30 = arith.truncf %29 : vector<2x8x2xf32> to vector<2x8x2xbf16>
    %c0_19 = arith.constant 0 : index
    %c0_20 = arith.constant 0 : index
    %c0_21 = arith.constant 0 : index
    %31 = vector.load %arg10[%c0_19, %c0_20, %c0_21] : memref<2x2x4xbf16, #tpu.memory_space<vmem>>, vector<2x2x4xbf16>
    "tpu.trace_start"() <{level = 10 : i32, message = "hqe,hed->hqd"}> : () -> ()
    %cst_22 = arith.constant dense<0.000000e+00> : vector<2x8x4xf32>
    %32 = tpu.matmul %30, %31, %cst_22 {dimension_numbers = #tpu.dot_dimension_numbers<[2], [1], [1], [2], [0, 0, 0, 1, 1, 2], [0], [0]>} : vector<2x8x2xbf16>, vector<2x2x4xbf16>, vector<2x8x4xf32> -> vector<2x8x4xf32>
    "tpu.trace_stop"() : () -> ()
    %cst_23 = arith.constant dense<0.000000e+00> : vector<8x4xf32>
    %33 = vector.multi_reduction <add>, %32, %cst_23 [0] : vector<2x8x4xf32> to vector<8x4xf32>
    %c0_24 = arith.constant 0 : index
    %c0_25 = arith.constant 0 : index
    %34 = vector.load %arg11[%c0_24, %c0_25] : memref<1x4xf32, #tpu.memory_space<vmem>>, vector<1x4xf32>
    %35 = vector.broadcast %34 : vector<1x4xf32> to vector<8x4xf32>
    %36 = arith.addf %33, %35 : vector<8x4xf32>
    %37 = arith.addf %1, %36 : vector<8x4xf32>
    %c0_26 = arith.constant 0 : index
    %c0_27 = arith.constant 0 : index
    %38 = vector.load %arg12[%c0_26, %c0_27] : memref<1x4xf32, #tpu.memory_space<vmem>>, vector<1x4xf32>
    %c0_28 = arith.constant 0 : index
    %c0_29 = arith.constant 0 : index
    %39 = vector.load %arg13[%c0_28, %c0_29] : memref<1x4xf32, #tpu.memory_space<vmem>>, vector<1x4xf32>
    %cst_30 = arith.constant dense<0.000000e+00> : vector<8xf32>
    %40 = vector.multi_reduction <add>, %37, %cst_30 [1] : vector<8x4xf32> to vector<8xf32>
    %41 = vector.shape_cast %40 : vector<8xf32> to vector<8x1xf32>
    %cst_31 = arith.constant 4.000000e+00 : f32
    %42 = vector.broadcast %cst_31 : f32 to vector<8x1xf32>
    %43 = arith.divf %41, %42 : vector<8x1xf32>
    %44 = vector.broadcast %43 : vector<8x1xf32> to vector<8x4xf32>
    %45 = arith.subf %37, %44 : vector<8x4xf32>
    %46 = arith.mulf %45, %45 : vector<8x4xf32>
    %cst_32 = arith.constant dense<0.000000e+00> : vector<8xf32>
    %47 = vector.multi_reduction <add>, %46, %cst_32 [1] : vector<8x4xf32> to vector<8xf32>
    %48 = vector.shape_cast %47 : vector<8xf32> to vector<8x1xf32>
    %cst_33 = arith.constant 4.000000e+00 : f32
    %49 = vector.broadcast %cst_33 : f32 to vector<8x1xf32>
    %50 = arith.divf %48, %49 : vector<8x1xf32>
    %51 = vector.broadcast %43 : vector<8x1xf32> to vector<8x4xf32>
    %52 = arith.subf %37, %51 : vector<8x4xf32>
    %cst_34 = arith.constant 9.99999974E-6 : f32
    %53 = vector.broadcast %cst_34 : f32 to vector<8x1xf32>
    %54 = arith.addf %50, %53 : vector<8x1xf32>
    %55 = math.rsqrt %54 : vector<8x1xf32>
    %56 = vector.broadcast %55 : vector<8x1xf32> to vector<8x4xf32>
    %57 = arith.mulf %52, %56 : vector<8x4xf32>
    %58 = vector.broadcast %38 : vector<1x4xf32> to vector<8x4xf32>
    %59 = arith.mulf %57, %58 : vector<8x4xf32>
    %60 = vector.broadcast %39 : vector<1x4xf32> to vector<8x4xf32>
    %61 = arith.addf %59, %60 : vector<8x4xf32>
    %62 = arith.truncf %61 : vector<8x4xf32> to vector<8x4xbf16>
    %c0_35 = arith.constant 0 : index
    %c0_36 = arith.constant 0 : index
    %63 = vector.load %arg14[%c0_35, %c0_36] : memref<4x4xbf16, #tpu.memory_space<vmem>>, vector<4x4xbf16>
    %cst_37 = arith.constant dense<0.000000e+00> : vector<8x4xf32>
    %64 = tpu.matmul %62, %63, %cst_37 {dimension_numbers = #tpu.dot_dimension_numbers<[1], [0], [0], [1], [0, 0, 1, 1], [], []>} : vector<8x4xbf16>, vector<4x4xbf16>, vector<8x4xf32> -> vector<8x4xf32>
    %c0_38 = arith.constant 0 : index
    %c0_39 = arith.constant 0 : index
    %65 = vector.load %arg15[%c0_38, %c0_39] : memref<1x4xf32, #tpu.memory_space<vmem>>, vector<1x4xf32>
    %66 = vector.broadcast %65 : vector<1x4xf32> to vector<8x4xf32>
    %67 = arith.addf %64, %66 : vector<8x4xf32>
    %cst_40 = arith.constant 0.000000e+00 : f32
    %68 = vector.broadcast %cst_40 : f32 to vector<8x4xf32>
    %69 = arith.maximumf %67, %68 : vector<8x4xf32>
    %70 = arith.truncf %69 : vector<8x4xf32> to vector<8x4xbf16>
    %c0_41 = arith.constant 0 : index
    %c0_42 = arith.constant 0 : index
    %71 = vector.load %arg16[%c0_41, %c0_42] : memref<4x4xbf16, #tpu.memory_space<vmem>>, vector<4x4xbf16>
    %cst_43 = arith.constant dense<0.000000e+00> : vector<8x4xf32>
    %72 = tpu.matmul %70, %71, %cst_43 {dimension_numbers = #tpu.dot_dimension_numbers<[1], [0], [0], [1], [0, 0, 1, 1], [], []>} : vector<8x4xbf16>, vector<4x4xbf16>, vector<8x4xf32> -> vector<8x4xf32>
    %c0_44 = arith.constant 0 : index
    %c0_45 = arith.constant 0 : index
    %73 = vector.load %arg17[%c0_44, %c0_45] : memref<1x4xf32, #tpu.memory_space<vmem>>, vector<1x4xf32>
    %74 = vector.broadcast %73 : vector<1x4xf32> to vector<8x4xf32>
    %75 = arith.addf %72, %74 : vector<8x4xf32>
    %76 = arith.addf %61, %75 : vector<8x4xf32>
    %c0_46 = arith.constant 0 : index
    %c0_47 = arith.constant 0 : index
    %77 = vector.load %arg18[%c0_46, %c0_47] : memref<1x4xf32, #tpu.memory_space<vmem>>, vector<1x4xf32>
    %c0_48 = arith.constant 0 : index
    %c0_49 = arith.constant 0 : index
    %78 = vector.load %arg19[%c0_48, %c0_49] : memref<1x4xf32, #tpu.memory_space<vmem>>, vector<1x4xf32>
    %cst_50 = arith.constant dense<0.000000e+00> : vector<8xf32>
    %79 = vector.multi_reduction <add>, %76, %cst_50 [1] : vector<8x4xf32> to vector<8xf32>
    %80 = vector.shape_cast %79 : vector<8xf32> to vector<8x1xf32>
    %cst_51 = arith.constant 4.000000e+00 : f32
    %81 = vector.broadcast %cst_51 : f32 to vector<8x1xf32>
    %82 = arith.divf %80, %81 : vector<8x1xf32>
    %83 = vector.broadcast %82 : vector<8x1xf32> to vector<8x4xf32>
    %84 = arith.subf %76, %83 : vector<8x4xf32>
    %85 = arith.mulf %84, %84 : vector<8x4xf32>
    %cst_52 = arith.constant dense<0.000000e+00> : vector<8xf32>
    %86 = vector.multi_reduction <add>, %85, %cst_52 [1] : vector<8x4xf32> to vector<8xf32>
    %87 = vector.shape_cast %86 : vector<8xf32> to vector<8x1xf32>
    %cst_53 = arith.constant 4.000000e+00 : f32
    %88 = vector.broadcast %cst_53 : f32 to vector<8x1xf32>
    %89 = arith.divf %87, %88 : vector<8x1xf32>
    %90 = vector.broadcast %82 : vector<8x1xf32> to vector<8x4xf32>
    %91 = arith.subf %76, %90 : vector<8x4xf32>
    %cst_54 = arith.constant 9.99999974E-6 : f32
    %92 = vector.broadcast %cst_54 : f32 to vector<8x1xf32>
    %93 = arith.addf %89, %92 : vector<8x1xf32>
    %94 = math.rsqrt %93 : vector<8x1xf32>
    %95 = vector.broadcast %94 : vector<8x1xf32> to vector<8x4xf32>
    %96 = arith.mulf %91, %95 : vector<8x4xf32>
    %97 = vector.broadcast %77 : vector<1x4xf32> to vector<8x4xf32>
    %98 = arith.mulf %96, %97 : vector<8x4xf32>
    %99 = vector.broadcast %78 : vector<1x4xf32> to vector<8x4xf32>
    %100 = arith.addf %98, %99 : vector<8x4xf32>
    %c0_55 = arith.constant 0 : index
    %c0_56 = arith.constant 0 : index
    %c0_57 = arith.constant 0 : index
    %101 = vector.load %arg20[%c0_55, %c0_56, %c0_57] : memref<1x8x4xf32, #tpu.memory_space<vmem>>, vector<1x8x4xf32>
    %102 = vector.shape_cast %101 : vector<1x8x4xf32> to vector<8x4xf32>
    %103 = vector.shape_cast %100 : vector<8x4xf32> to vector<1x8x4xf32>
    tpu.vector_store %arg20[%c0_55, %c0_56, %c0_57], %103 {strides = array<i32>} : memref<1x8x4xf32, #tpu.memory_space<vmem>>, vector<1x8x4xf32>,
    return
  }
  func.func @transform_0(%arg0: i32, %arg1: i32) -> (i32, i32, i32) {
    %c0_i32 = arith.constant 0 : i32
    %c0_i32_0 = arith.constant 0 : i32
    return %arg0, %arg1, %c0_i32 : i32, i32, i32
  }
  func.func @transform_1(%arg0: i32, %arg1: i32) -> (i32, i32, i32) {
    %c0_i32 = arith.constant 0 : i32
    %c0_i32_0 = arith.constant 0 : i32
    %c0_i32_1 = arith.constant 0 : i32
    return %arg0, %c0_i32, %c0_i32_0 : i32, i32, i32
  }
  func.func @transform_2(%arg0: i32, %arg1: i32) -> (i32, i32, i32) {
    %c0_i32 = arith.constant 0 : i32
    %c0_i32_0 = arith.constant 0 : i32
    %c0_i32_1 = arith.constant 0 : i32
    %c0_i32_2 = arith.constant 0 : i32
    return %c0_i32, %c0_i32_0, %c0_i32_1 : i32, i32, i32
  }
  func.func @transform_3(%arg0: i32, %arg1: i32) -> (i32, i32, i32) {
    %c0_i32 = arith.constant 0 : i32
    %c0_i32_0 = arith.constant 0 : i32
    %c0_i32_1 = arith.constant 0 : i32
    %c0_i32_2 = arith.constant 0 : i32
    return %c0_i32, %c0_i32_0, %c0_i32_1 : i32, i32, i32
  }
  func.func @transform_4(%arg0: i32, %arg1: i32) -> (i32, i32, i32) {
    %c0_i32 = arith.constant 0 : i32
    %c0_i32_0 = arith.constant 0 : i32
    %c0_i32_1 = arith.constant 0 : i32
    %c0_i32_2 = arith.constant 0 : i32
    return %c0_i32, %c0_i32_0, %c0_i32_1 : i32, i32, i32
  }
  func.func @transform_5(%arg0: i32, %arg1: i32) -> (i32, i32, i32) {
    %c0_i32 = arith.constant 0 : i32
    %c0_i32_0 = arith.constant 0 : i32
    %c0_i32_1 = arith.constant 0 : i32
    %c0_i32_2 = arith.constant 0 : i32
    return %c0_i32, %c0_i32_0, %c0_i32_1 : i32, i32, i32
  }
  func.func @transform_6(%arg0: i32, %arg1: i32) -> (i32, i32, i32) {
    %c0_i32 = arith.constant 0 : i32
    %c0_i32_0 = arith.constant 0 : i32
    %c0_i32_1 = arith.constant 0 : i32
    %c0_i32_2 = arith.constant 0 : i32
    return %c0_i32, %c0_i32_0, %c0_i32_1 : i32, i32, i32
  }
  func.func @transform_7(%arg0: i32, %arg1: i32) -> (i32, i32, i32) {
    %c0_i32 = arith.constant 0 : i32
    %c0_i32_0 = arith.constant 0 : i32
    %c0_i32_1 = arith.constant 0 : i32
    %c0_i32_2 = arith.constant 0 : i32
    return %c0_i32, %c0_i32_0, %c0_i32_1 : i32, i32, i32
  }
  func.func @transform_8(%arg0: i32, %arg1: i32) -> (i32, i32, i32) {
    %c0_i32 = arith.constant 0 : i32
    %c0_i32_0 = arith.constant 0 : i32
    %c0_i32_1 = arith.constant 0 : i32
    %c0_i32_2 = arith.constant 0 : i32
    return %c0_i32, %c0_i32_0, %c0_i32_1 : i32, i32, i32
  }
  func.func @transform_9(%arg0: i32, %arg1: i32) -> (i32, i32) {
    %c0_i32 = arith.constant 0 : i32
    %c0_i32_0 = arith.constant 0 : i32
    %c0_i32_1 = arith.constant 0 : i32
    return %c0_i32, %c0_i32_0 : i32, i32
  }
  func.func @transform_10(%arg0: i32, %arg1: i32) -> (i32, i32) {
    %c0_i32 = arith.constant 0 : i32
    %c0_i32_0 = arith.constant 0 : i32
    %c0_i32_1 = arith.constant 0 : i32
    return %c0_i32, %c0_i32_0 : i32, i32
  }
  func.func @transform_11(%arg0: i32, %arg1: i32) -> (i32, i32) {
    %c0_i32 = arith.constant 0 : i32
    %c0_i32_0 = arith.constant 0 : i32
    %c0_i32_1 = arith.constant 0 : i32
    return %c0_i32, %c0_i32_0 : i32, i32
  }
  func.func @transform_12(%arg0: i32, %arg1: i32) -> (i32, i32) {
    %c0_i32 = arith.constant 0 : i32
    %c0_i32_0 = arith.constant 0 : i32
    %c0_i32_1 = arith.constant 0 : i32
    return %c0_i32, %c0_i32_0 : i32, i32
  }
  func.func @transform_13(%arg0: i32, %arg1: i32) -> (i32, i32) {
    %c0_i32 = arith.constant 0 : i32
    %c0_i32_0 = arith.constant 0 : i32
    %c0_i32_1 = arith.constant 0 : i32
    return %c0_i32, %c0_i32_0 : i32, i32
  }
  func.func @transform_14(%arg0: i32, %arg1: i32) -> (i32, i32) {
    %c0_i32 = arith.constant 0 : i32
    %c0_i32_0 = arith.constant 0 : i32
    %c0_i32_1 = arith.constant 0 : i32
    return %c0_i32, %c0_i32_0 : i32, i32
  }
  func.func @transform_15(%arg0: i32, %arg1: i32) -> (i32, i32) {
    %c0_i32 = arith.constant 0 : i32
    %c0_i32_0 = arith.constant 0 : i32
    %c0_i32_1 = arith.constant 0 : i32
    return %c0_i32, %c0_i32_0 : i32, i32
  }
  func.func @transform_16(%arg0: i32, %arg1: i32) -> (i32, i32) {
    %c0_i32 = arith.constant 0 : i32
    %c0_i32_0 = arith.constant 0 : i32
    %c0_i32_1 = arith.constant 0 : i32
    return %c0_i32, %c0_i32_0 : i32, i32
  }
  func.func @transform_17(%arg0: i32, %arg1: i32) -> (i32, i32) {
    %c0_i32 = arith.constant 0 : i32
    %c0_i32_0 = arith.constant 0 : i32
    %c0_i32_1 = arith.constant 0 : i32
    return %c0_i32, %c0_i32_0 : i32, i32
  }
  func.func @transform_18(%arg0: i32, %arg1: i32) -> (i32, i32, i32) {
    %c0_i32 = arith.constant 0 : i32
    %c0_i32_0 = arith.constant 0 : i32
    return %arg0, %arg1, %c0_i32 : i32, i32, i32
  }
}

</mosaic_0001>

<llo_original>
// kernel: tpu_custom_call.1
$region0: #{tpu_custom_call.1}
  #allocation0 [shape = 'u32[]', space=smem, size = 0x4, offset = 0x4, fixed_abs, tag = 'smem constant byte address 0x4 - core index']
  #allocation1 [shape = 'u32[144,128]{1,0:T(1,128)}', space=vmem, size = 0x12000, scoped, tag = 'internal scratch']
  #allocation2 [shape = 'bf16[2,8,2]{2,1,0:T(8,128)(2,1)}', space=vmem, size = 0x1000, scoped, tag = 'scratch operand']
  #allocation3 [shape = 'bf16[2,8,2]{2,1,0:T(8,128)(2,1)}', space=vmem, size = 0x1000, scoped, tag = 'scratch operand']
  %s0 = inlined_call_operand.vmem [shape: f32[2,8,4], index: 0, kind: input, shape index: {}]
  %s1 = inlined_call_operand.vmem [shape: bf16[2,8,4], index: 1, kind: input, shape index: {}]
  %s2 = inlined_call_operand.vmem [shape: bf16[2,4,2], index: 2, kind: input, shape index: {}]
  %s3 = inlined_call_operand.vmem [shape: f32[2,1,2], index: 3, kind: input, shape index: {}]
  %s4 = inlined_call_operand.vmem [shape: bf16[2,4,2], index: 4, kind: input, shape index: {}]
  %s5 = inlined_call_operand.vmem [shape: f32[2,1,2], index: 5, kind: input, shape index: {}]
  %s6 = inlined_call_operand.vmem [shape: bf16[2,4,2], index: 6, kind: input, shape index: {}]
  %s7 = inlined_call_operand.vmem [shape: f32[2,1,2], index: 7, kind: input, shape index: {}]
  %s8 = inlined_call_operand.vmem [shape: bf16[2,2,4], index: 8, kind: input, shape index: {}]
  %s9 = inlined_call_operand.vmem [shape: f32[1,4], index: 9, kind: input, shape index: {}]
  %s10 = inlined_call_operand.vmem [shape: f32[1,4], index: 10, kind: input, shape index: {}]
  %s11 = inlined_call_operand.vmem [shape: f32[1,4], index: 11, kind: input, shape index: {}]
  %s12 = inlined_call_operand.vmem [shape: bf16[4,4], index: 12, kind: input, shape index: {}]
  %s13 = inlined_call_operand.vmem [shape: f32[1,4], index: 13, kind: input, shape index: {}]
  %s14 = inlined_call_operand.vmem [shape: bf16[4,4], index: 14, kind: input, shape index: {}]
  %s15 = inlined_call_operand.vmem [shape: f32[1,4], index: 15, kind: input, shape index: {}]
  %s16 = inlined_call_operand.vmem [shape: f32[1,4], index: 16, kind: input, shape index: {}]
  %s17 = inlined_call_operand.vmem [shape: f32[1,4], index: 17, kind: input, shape index: {}]
  %s18 = inlined_call_operand.vmem [shape: f32[2,8,4], index: 18, kind: output, shape index: {}]
  %s19 = sld [smem:[#allocation0]]
  $region109: #{tpu_custom_call.1} parent=0
    _
  %s21 = ssub.s32 1, %s19
  %s22 = scalar_select 0, %s21, %s19
  loop: start=0, step=1, limit=4
  $region2: #{tpu_custom_call.1} parent=0 // loop_pre_header
    _
  $region3: #{tpu_custom_call.1} parent=0 // loop_header
    %s24 = sphi 0, %s28
    %p25 = scmp.ge.s32.totalorder %s24, 4
    %s31 = sphi 0, %s43
    %s32 = sphi 0, %s39
    %s33 = sphi 0, %s31
    %s34 = sphi 0, %s32
    %s35 = sphi 0, %s33
    %s36 = sphi 0, %s34
    %s48 = sphi 0, %s50
    %s51 = sphi 0, %s48
    %s52 = sphi 0, %s51
    %s68 = sphi 0, %s52
    %s74 = sphi 0, %s76
    %s77 = sphi 0, %s74
    %s78 = sphi 0, %s77
    %s94 = sphi 0, %s78
    %s98 = sphi 0, %s98
    %s100 = sphi 0, %s98
    %s101 = sphi 0, %s100
    %s115 = sphi 0, %s101
    %s119 = sphi 0, %s119
    %s121 = sphi 0, %s119
    %s122 = sphi 0, %s121
    %s136 = sphi 0, %s122
    %s140 = sphi 0, %s140
    %s142 = sphi 0, %s140
    %s143 = sphi 0, %s142
    %s157 = sphi 0, %s143
    %s161 = sphi 0, %s161
    %s163 = sphi 0, %s161
    %s164 = sphi 0, %s163
    %s178 = sphi 0, %s164
    %s182 = sphi 0, %s182
    %s184 = sphi 0, %s182
    %s185 = sphi 0, %s184
    %s199 = sphi 0, %s185
    %s203 = sphi 0, %s203
    %s205 = sphi 0, %s203
    %s206 = sphi 0, %s205
    %s220 = sphi 0, %s206
    %s224 = sphi 0, %s224
    %s226 = sphi 0, %s224
    %s227 = sphi 0, %s226
    %s241 = sphi 0, %s227
    %s245 = sphi 0, %s245
    %s247 = sphi 0, %s245
    %s248 = sphi 0, %s247
    %s262 = sphi 0, %s248
    %s266 = sphi 0, %s266
    %s268 = sphi 0, %s266
    %s269 = sphi 0, %s268
    %s283 = sphi 0, %s269
    %s287 = sphi 0, %s287
    %s289 = sphi 0, %s287
    %s290 = sphi 0, %s289
    %s304 = sphi 0, %s290
    %s308 = sphi 0, %s308
    %s310 = sphi 0, %s308
    %s311 = sphi 0, %s310
    %s325 = sphi 0, %s311
    %s329 = sphi 0, %s329
    %s331 = sphi 0, %s329
    %s332 = sphi 0, %s331
    %s346 = sphi 0, %s332
    %s350 = sphi 0, %s350
    %s352 = sphi 0, %s350
    %s353 = sphi 0, %s352
    %s367 = sphi 0, %s353
    %s371 = sphi 0, %s371
    %s373 = sphi 0, %s371
    %s374 = sphi 0, %s373
    %s388 = sphi 0, %s374
    %s392 = sphi 0, %s392
    %s394 = sphi 0, %s392
    %s395 = sphi 0, %s394
    %s409 = sphi 0, %s395
    %s413 = sphi 0, %s413
    %s415 = sphi 0, %s413
    %s416 = sphi 0, %s415
    %s430 = sphi 0, %s416
    %s438 = sphi 0, %s440
    %s441 = sphi 0, %s438
    %s442 = sphi 0, %s441
    %s458 = sphi 0, %s442
  $region4: #{tpu_custom_call.1} parent=0 // loop_header_branch
    %27 = sbr.rel (%p25) target = $region8
  $region5: #{tpu_custom_call.1} parent=0 // loop_body
    %s29 = ssub.s32 %s24, 1
    %s30 = ssub.s32 %s24, 2
    %s37 = sadd.s32 1, %s32
    %p38 = scmp.ge.s32.totalorder %s37, 1
    %s39 = scalar_select %p38, 0, %s37
    %s40 = sadd.s32 1, %s31
    %s41 = scalar_select %p38, %s40, %s31
    %p42 = scmp.ge.s32.totalorder %s41, 2
    %s43 = scalar_select %p42, 0, %s41
    %s44 = ssub.s32 %s31, %s43
    %s45 = ssub.s32 %s32, %s39
    %s46 = sor.u32 %s44, %s45
    %p47 = scmp.eq.s32.totalorder %s46, 0
    %s49 = sadd.s32 %s48, 1
    %s50 = scalar_select %p47, %s48, %s49
    %p53 = pneg %p47
    %p54 = scmp.eq.s32.totalorder %s24, 1
    %p55 = por %p53, %p54
    %p56 = scmp.ne.s32.totalorder %s48, %s51
    %p57 = scmp.eq.s32.totalorder %s24, 0
    %p58 = por %p56, %p57
    %p59 = scmp.ne.s32.totalorder %s48, %s51
    %p60 = scmp.eq.s32.totalorder %s29, 1
    %p61 = por %p59, %p60
    %p62 = scmp.ne.s32.totalorder %s51, %s52
    %p63 = scmp.eq.s32.totalorder %s29, 0
    %p64 = por %p62, %p63
    %p65 = scmp.ne.s32.totalorder %s51, %s52
    %p66 = scmp.eq.s32.totalorder %s30, 1
    %p67 = por %p65, %p66
    %p69 = scmp.ne.s32.totalorder %s52, %s68
    %p70 = scmp.eq.s32.totalorder %s30, 0
    %p71 = por %p69, %p70
    %s72 = ssub.s32 %s31, %s43
    %p73 = scmp.eq.s32.totalorder %s72, 0
    %s75 = sadd.s32 %s74, 1
    %s76 = scalar_select %p73, %s74, %s75
    %p79 = pneg %p73
    %p80 = scmp.eq.s32.totalorder %s24, 1
    %p81 = por %p79, %p80
    %p82 = scmp.ne.s32.totalorder %s74, %s77
    %p83 = scmp.eq.s32.totalorder %s24, 0
    %p84 = por %p82, %p83
    %p85 = scmp.ne.s32.totalorder %s74, %s77
    %p86 = scmp.eq.s32.totalorder %s29, 1
    %p87 = por %p85, %p86
    %p88 = scmp.ne.s32.totalorder %s77, %s78
    %p89 = scmp.eq.s32.totalorder %s29, 0
    %p90 = por %p88, %p89
    %p91 = scmp.ne.s32.totalorder %s77, %s78
    %p92 = scmp.eq.s32.totalorder %s30, 1
    %p93 = por %p91, %p92
    %p95 = scmp.ne.s32.totalorder %s78, %s94
    %p96 = scmp.eq.s32.totalorder %s30, 0
    %p97 = por %p95, %p96
    %s99 = sadd.s32 %s98, 1
    %p102 = scmp.eq.s32.totalorder %s24, 1
    %p103 = scmp.ne.s32.totalorder %s98, %s100
    %p104 = scmp.eq.s32.totalorder %s24, 0
    %p105 = por %p103, %p104
    %p106 = scmp.ne.s32.totalorder %s98, %s100
    %p107 = scmp.eq.s32.totalorder %s29, 1
    %p108 = por %p106, %p107
    %p109 = scmp.ne.s32.totalorder %s100, %s101
    %p110 = scmp.eq.s32.totalorder %s29, 0
    %p111 = por %p109, %p110
    %p112 = scmp.ne.s32.totalorder %s100, %s101
    %p113 = scmp.eq.s32.totalorder %s30, 1
    %p114 = por %p112, %p113
    %p116 = scmp.ne.s32.totalorder %s101, %s115
    %p117 = scmp.eq.s32.totalorder %s30, 0
    %p118 = por %p116, %p117
    %s120 = sadd.s32 %s119, 1
    %p123 = scmp.eq.s32.totalorder %s24, 1
    %p124 = scmp.ne.s32.totalorder %s119, %s121
    %p125 = scmp.eq.s32.totalorder %s24, 0
    %p126 = por %p124, %p125
    %p127 = scmp.ne.s32.totalorder %s119, %s121
    %p128 = scmp.eq.s32.totalorder %s29, 1
    %p129 = por %p127, %p128
    %p130 = scmp.ne.s32.totalorder %s121, %s122
    %p131 = scmp.eq.s32.totalorder %s29, 0
    %p132 = por %p130, %p131
    %p133 = scmp.ne.s32.totalorder %s121, %s122
    %p134 = scmp.eq.s32.totalorder %s30, 1
    %p135 = por %p133, %p134
    %p137 = scmp.ne.s32.totalorder %s122, %s136
    %p138 = scmp.eq.s32.totalorder %s30, 0
    %p139 = por %p137, %p138
    %s141 = sadd.s32 %s140, 1
    %p144 = scmp.eq.s32.totalorder %s24, 1
    %p145 = scmp.ne.s32.totalorder %s140, %s142
    %p146 = scmp.eq.s32.totalorder %s24, 0
    %p147 = por %p145, %p146
    %p148 = scmp.ne.s32.totalorder %s140, %s142
    %p149 = scmp.eq.s32.totalorder %s29, 1
    %p150 = por %p148, %p149
    %p151 = scmp.ne.s32.totalorder %s142, %s143
    %p152 = scmp.eq.s32.totalorder %s29, 0
    %p153 = por %p151, %p152
    %p154 = scmp.ne.s32.totalorder %s142, %s143
    %p155 = scmp.eq.s32.totalorder %s30, 1
    %p156 = por %p154, %p155
    %p158 = scmp.ne.s32.totalorder %s143, %s157
    %p159 = scmp.eq.s32.totalorder %s30, 0
    %p160 = por %p158, %p159
    %s162 = sadd.s32 %s161, 1
    %p165 = scmp.eq.s32.totalorder %s24, 1
    %p166 = scmp.ne.s32.totalorder %s161, %s163
    %p167 = scmp.eq.s32.totalorder %s24, 0
    %p168 = por %p166, %p167
    %p169 = scmp.ne.s32.totalorder %s161, %s163
    %p170 = scmp.eq.s32.totalorder %s29, 1
    %p171 = por %p169, %p170
    %p172 = scmp.ne.s32.totalorder %s163, %s164
    %p173 = scmp.eq.s32.totalorder %s29, 0
    %p174 = por %p172, %p173
    %p175 = scmp.ne.s32.totalorder %s163, %s164
    %p176 = scmp.eq.s32.totalorder %s30, 1
    %p177 = por %p175, %p176
    %p179 = scmp.ne.s32.totalorder %s164, %s178
    %p180 = scmp.eq.s32.totalorder %s30, 0
    %p181 = por %p179, %p180
    %s183 = sadd.s32 %s182, 1
    %p186 = scmp.eq.s32.totalorder %s24, 1
    %p187 = scmp.ne.s32.totalorder %s182, %s184
    %p188 = scmp.eq.s32.totalorder %s24, 0
    %p189 = por %p187, %p188
    %p190 = scmp.ne.s32.totalorder %s182, %s184
    %p191 = scmp.eq.s32.totalorder %s29, 1
    %p192 = por %p190, %p191
    %p193 = scmp.ne.s32.totalorder %s184, %s185
    %p194 = scmp.eq.s32.totalorder %s29, 0
    %p195 = por %p193, %p194
    %p196 = scmp.ne.s32.totalorder %s184, %s185
    %p197 = scmp.eq.s32.totalorder %s30, 1
    %p198 = por %p196, %p197
    %p200 = scmp.ne.s32.totalorder %s185, %s199
    %p201 = scmp.eq.s32.totalorder %s30, 0
    %p202 = por %p200, %p201
    %s204 = sadd.s32 %s203, 1
    %p207 = scmp.eq.s32.totalorder %s24, 1
    %p208 = scmp.ne.s32.totalorder %s203, %s205
    %p209 = scmp.eq.s32.totalorder %s24, 0
    %p210 = por %p208, %p209
    %p211 = scmp.ne.s32.totalorder %s203, %s205
    %p212 = scmp.eq.s32.totalorder %s29, 1
    %p213 = por %p211, %p212
    %p214 = scmp.ne.s32.totalorder %s205, %s206
    %p215 = scmp.eq.s32.totalorder %s29, 0
    %p216 = por %p214, %p215
    %p217 = scmp.ne.s32.totalorder %s205, %s206
    %p218 = scmp.eq.s32.totalorder %s30, 1
    %p219 = por %p217, %p218
    %p221 = scmp.ne.s32.totalorder %s206, %s220
    %p222 = scmp.eq.s32.totalorder %s30, 0
    %p223 = por %p221, %p222
    %s225 = sadd.s32 %s224, 1
    %p228 = scmp.eq.s32.totalorder %s24, 1
    %p229 = scmp.ne.s32.totalorder %s224, %s226
    %p230 = scmp.eq.s32.totalorder %s24, 0
    %p231 = por %p229, %p230
    %p232 = scmp.ne.s32.totalorder %s224, %s226
    %p233 = scmp.eq.s32.totalorder %s29, 1
    %p234 = por %p232, %p233
    %p235 = scmp.ne.s32.totalorder %s226, %s227
    %p236 = scmp.eq.s32.totalorder %s29, 0
    %p237 = por %p235, %p236
    %p238 = scmp.ne.s32.totalorder %s226, %s227
    %p239 = scmp.eq.s32.totalorder %s30, 1
    %p240 = por %p238, %p239
    %p242 = scmp.ne.s32.totalorder %s227, %s241
    %p243 = scmp.eq.s32.totalorder %s30, 0
    %p244 = por %p242, %p243
    %s246 = sadd.s32 %s245, 1
    %p249 = scmp.eq.s32.totalorder %s24, 1
    %p250 = scmp.ne.s32.totalorder %s245, %s247
    %p251 = scmp.eq.s32.totalorder %s24, 0
    %p252 = por %p250, %p251
    %p253 = scmp.ne.s32.totalorder %s245, %s247
    %p254 = scmp.eq.s32.totalorder %s29, 1
    %p255 = por %p253, %p254
    %p256 = scmp.ne.s32.totalorder %s247, %s248
    %p257 = scmp.eq.s32.totalorder %s29, 0
    %p258 = por %p256, %p257
    %p259 = scmp.ne.s32.totalorder %s247, %s248
    %p260 = scmp.eq.s32.totalorder %s30, 1
    %p261 = por %p259, %p260
    %p263 = scmp.ne.s32.totalorder %s248, %s262
    %p264 = scmp.eq.s32.totalorder %s30, 0
    %p265 = por %p263, %p264
    %s267 = sadd.s32 %s266, 1
    %p270 = scmp.eq.s32.totalorder %s24, 1
    %p271 = scmp.ne.s32.totalorder %s266, %s268
    %p272 = scmp.eq.s32.totalorder %s24, 0
    %p273 = por %p271, %p272
    %p274 = scmp.ne.s32.totalorder %s266, %s268
    %p275 = scmp.eq.s32.totalorder %s29, 1
    %p276 = por %p274, %p275
    %p277 = scmp.ne.s32.totalorder %s268, %s269
    %p278 = scmp.eq.s32.totalorder %s29, 0
    %p279 = por %p277, %p278
    %p280 = scmp.ne.s32.totalorder %s268, %s269
    %p281 = scmp.eq.s32.totalorder %s30, 1
    %p282 = por %p280, %p281
    %p284 = scmp.ne.s32.totalorder %s269, %s283
    %p285 = scmp.eq.s32.totalorder %s30, 0
    %p286 = por %p284, %p285
    %s288 = sadd.s32 %s287, 1
    %p291 = scmp.eq.s32.totalorder %s24, 1
    %p292 = scmp.ne.s32.totalorder %s287, %s289
    %p293 = scmp.eq.s32.totalorder %s24, 0
    %p294 = por %p292, %p293
    %p295 = scmp.ne.s32.totalorder %s287, %s289
    %p296 = scmp.eq.s32.totalorder %s29, 1
    %p297 = por %p295, %p296
    %p298 = scmp.ne.s32.totalorder %s289, %s290
    %p299 = scmp.eq.s32.totalorder %s29, 0
    %p300 = por %p298, %p299
    %p301 = scmp.ne.s32.totalorder %s289, %s290
    %p302 = scmp.eq.s32.totalorder %s30, 1
    %p303 = por %p301, %p302
    %p305 = scmp.ne.s32.totalorder %s290, %s304
    %p306 = scmp.eq.s32.totalorder %s30, 0
    %p307 = por %p305, %p306
    %s309 = sadd.s32 %s308, 1
    %p312 = scmp.eq.s32.totalorder %s24, 1
    %p313 = scmp.ne.s32.totalorder %s308, %s310
    %p314 = scmp.eq.s32.totalorder %s24, 0
    %p315 = por %p313, %p314
    %p316 = scmp.ne.s32.totalorder %s308, %s310
    %p317 = scmp.eq.s32.totalorder %s29, 1
    %p318 = por %p316, %p317
    %p319 = scmp.ne.s32.totalorder %s310, %s311
    %p320 = scmp.eq.s32.totalorder %s29, 0
    %p321 = por %p319, %p320
    %p322 = scmp.ne.s32.totalorder %s310, %s311
    %p323 = scmp.eq.s32.totalorder %s30, 1
    %p324 = por %p322, %p323
    %p326 = scmp.ne.s32.totalorder %s311, %s325
    %p327 = scmp.eq.s32.totalorder %s30, 0
    %p328 = por %p326, %p327
    %s330 = sadd.s32 %s329, 1
    %p333 = scmp.eq.s32.totalorder %s24, 1
    %p334 = scmp.ne.s32.totalorder %s329, %s331
    %p335 = scmp.eq.s32.totalorder %s24, 0
    %p336 = por %p334, %p335
    %p337 = scmp.ne.s32.totalorder %s329, %s331
    %p338 = scmp.eq.s32.totalorder %s29, 1
    %p339 = por %p337, %p338
    %p340 = scmp.ne.s32.totalorder %s331, %s332
    %p341 = scmp.eq.s32.totalorder %s29, 0
    %p342 = por %p340, %p341
    %p343 = scmp.ne.s32.totalorder %s331, %s332
    %p344 = scmp.eq.s32.totalorder %s30, 1
    %p345 = por %p343, %p344
    %p347 = scmp.ne.s32.totalorder %s332, %s346
    %p348 = scmp.eq.s32.totalorder %s30, 0
    %p349 = por %p347, %p348
    %s351 = sadd.s32 %s350, 1
    %p354 = scmp.eq.s32.totalorder %s24, 1
    %p355 = scmp.ne.s32.totalorder %s350, %s352
    %p356 = scmp.eq.s32.totalorder %s24, 0
    %p357 = por %p355, %p356
    %p358 = scmp.ne.s32.totalorder %s350, %s352
    %p359 = scmp.eq.s32.totalorder %s29, 1
    %p360 = por %p358, %p359
    %p361 = scmp.ne.s32.totalorder %s352, %s353
    %p362 = scmp.eq.s32.totalorder %s29, 0
    %p363 = por %p361, %p362
    %p364 = scmp.ne.s32.totalorder %s352, %s353
    %p365 = scmp.eq.s32.totalorder %s30, 1
    %p366 = por %p364, %p365
    %p368 = scmp.ne.s32.totalorder %s353, %s367
    %p369 = scmp.eq.s32.totalorder %s30, 0
    %p370 = por %p368, %p369
    %s372 = sadd.s32 %s371, 1
    %p375 = scmp.eq.s32.totalorder %s24, 1
    %p376 = scmp.ne.s32.totalorder %s371, %s373
    %p377 = scmp.eq.s32.totalorder %s24, 0
    %p378 = por %p376, %p377
    %p379 = scmp.ne.s32.totalorder %s371, %s373
    %p380 = scmp.eq.s32.totalorder %s29, 1
    %p381 = por %p379, %p380
    %p382 = scmp.ne.s32.totalorder %s373, %s374
    %p383 = scmp.eq.s32.totalorder %s29, 0
    %p384 = por %p382, %p383
    %p385 = scmp.ne.s32.totalorder %s373, %s374
    %p386 = scmp.eq.s32.totalorder %s30, 1
    %p387 = por %p385, %p386
    %p389 = scmp.ne.s32.totalorder %s374, %s388
    %p390 = scmp.eq.s32.totalorder %s30, 0
    %p391 = por %p389, %p390
    %s393 = sadd.s32 %s392, 1
    %p396 = scmp.eq.s32.totalorder %s24, 1
    %p397 = scmp.ne.s32.totalorder %s392, %s394
    %p398 = scmp.eq.s32.totalorder %s24, 0
    %p399 = por %p397, %p398
    %p400 = scmp.ne.s32.totalorder %s392, %s394
    %p401 = scmp.eq.s32.totalorder %s29, 1
    %p402 = por %p400, %p401
    %p403 = scmp.ne.s32.totalorder %s394, %s395
    %p404 = scmp.eq.s32.totalorder %s29, 0
    %p405 = por %p403, %p404
    %p406 = scmp.ne.s32.totalorder %s394, %s395
    %p407 = scmp.eq.s32.totalorder %s30, 1
    %p408 = por %p406, %p407
    %p410 = scmp.ne.s32.totalorder %s395, %s409
    %p411 = scmp.eq.s32.totalorder %s30, 0
    %p412 = por %p410, %p411
    %s414 = sadd.s32 %s413, 1
    %p417 = scmp.eq.s32.totalorder %s24, 1
    %p418 = scmp.ne.s32.totalorder %s413, %s415
    %p419 = scmp.eq.s32.totalorder %s24, 0
    %p420 = por %p418, %p419
    %p421 = scmp.ne.s32.totalorder %s413, %s415
    %p422 = scmp.eq.s32.totalorder %s29, 1
    %p423 = por %p421, %p422
    %p424 = scmp.ne.s32.totalorder %s415, %s416
    %p425 = scmp.eq.s32.totalorder %s29, 0
    %p426 = por %p424, %p425
    %p427 = scmp.ne.s32.totalorder %s415, %s416
    %p428 = scmp.eq.s32.totalorder %s30, 1
    %p429 = por %p427, %p428
    %p431 = scmp.ne.s32.totalorder %s416, %s430
    %p432 = scmp.eq.s32.totalorder %s30, 0
    %p433 = por %p431, %p432
    %s434 = ssub.s32 %s31, %s43
    %s435 = ssub.s32 %s32, %s39
    %s436 = sor.u32 %s434, %s435
    %p437 = scmp.eq.s32.totalorder %s436, 0
    %s439 = sadd.s32 %s438, 1
    %s440 = scalar_select %p437, %s438, %s439
    %p443 = pneg %p437
    %p444 = scmp.eq.s32.totalorder %s24, 1
    %p445 = por %p443, %p444
    %p446 = scmp.ne.s32.totalorder %s438, %s441
    %p447 = scmp.eq.s32.totalorder %s24, 0
    %p448 = por %p446, %p447
    %p449 = scmp.ne.s32.totalorder %s438, %s441
    %p450 = scmp.eq.s32.totalorder %s29, 1
    %p451 = por %p449, %p450
    %p452 = scmp.ne.s32.totalorder %s441, %s442
    %p453 = scmp.eq.s32.totalorder %s29, 0
    %p454 = por %p452, %p453
    %p455 = scmp.ne.s32.totalorder %s441, %s442
    %p456 = scmp.eq.s32.totalorder %s30, 1
    %p457 = por %p455, %p456
    %p459 = scmp.ne.s32.totalorder %s442, %s458
    %p460 = scmp.eq.s32.totalorder %s30, 0
    %p461 = por %p459, %p460
    %p462 = scmp.le.s32.totalorder 1, %s24
    %p463 = scmp.lt.s32.totalorder %s24, 3
    %p464 = pnand %p462, %p463
    %p465 = pneg %p464
    // Predicated region
    $region9: #{tpu_custom_call.1} parent=5 // pred_check
      _
    $region10: #{tpu_custom_call.1} parent=5 // pred_check_branch
      %467 = sbr.rel (%p464) target = $region12
    $region11: #{tpu_custom_call.1} parent=5 // pred_region
      %s468 = ssub.s32 %s24, 1
      // Predicated region
      $region13: #{tpu_custom_call.1} parent=11 // pred_check
        %p469 = pneg %p111
      $region14: #{tpu_custom_call.1} parent=11 // pred_check_branch
        %471 = sbr.rel (%p469) target = $region16
      $region15: #{tpu_custom_call.1} parent=11 // pred_region
        _
      $region16: #{tpu_custom_call.1} parent=11 // pred_fallthru
        _
      // Predicated region
      $region17: #{tpu_custom_call.1} parent=11 // pred_check
        %p472 = pneg %p132
      $region18: #{tpu_custom_call.1} parent=11 // pred_check_branch
        %474 = sbr.rel (%p472) target = $region20
      $region19: #{tpu_custom_call.1} parent=11 // pred_region
        _
      $region20: #{tpu_custom_call.1} parent=11 // pred_fallthru
        _
      // Predicated region
      $region21: #{tpu_custom_call.1} parent=11 // pred_check
        %p475 = pneg %p153
      $region22: #{tpu_custom_call.1} parent=11 // pred_check_branch
        %477 = sbr.rel (%p475) target = $region24
      $region23: #{tpu_custom_call.1} parent=11 // pred_region
        _
      $region24: #{tpu_custom_call.1} parent=11 // pred_fallthru
        _
      // Predicated region
      $region25: #{tpu_custom_call.1} parent=11 // pred_check
        %p478 = pneg %p174
      $region26: #{tpu_custom_call.1} parent=11 // pred_check_branch
        %480 = sbr.rel (%p478) target = $region28
      $region27: #{tpu_custom_call.1} parent=11 // pred_region
        _
      $region28: #{tpu_custom_call.1} parent=11 // pred_fallthru
        _
      // Predicated region
      $region29: #{tpu_custom_call.1} parent=11 // pred_check
        %p481 = pneg %p195
      $region30: #{tpu_custom_call.1} parent=11 // pred_check_branch
        %483 = sbr.rel (%p481) target = $region32
      $region31: #{tpu_custom_call.1} parent=11 // pred_region
        _
      $region32: #{tpu_custom_call.1} parent=11 // pred_fallthru
        _
      // Predicated region
      $region33: #{tpu_custom_call.1} parent=11 // pred_check
        %p484 = pneg %p216
      $region34: #{tpu_custom_call.1} parent=11 // pred_check_branch
        %486 = sbr.rel (%p484) target = $region36
      $region35: #{tpu_custom_call.1} parent=11 // pred_region
        _
      $region36: #{tpu_custom_call.1} parent=11 // pred_fallthru
        _
      // Predicated region
      $region37: #{tpu_custom_call.1} parent=11 // pred_check
        %p487 = pneg %p237
      $region38: #{tpu_custom_call.1} parent=11 // pred_check_branch
        %489 = sbr.rel (%p487) target = $region40
      $region39: #{tpu_custom_call.1} parent=11 // pred_region
        _
      $region40: #{tpu_custom_call.1} parent=11 // pred_fallthru
        _
      // Predicated region
      $region41: #{tpu_custom_call.1} parent=11 // pred_check
        %p490 = pneg %p258
      $region42: #{tpu_custom_call.1} parent=11 // pred_check_branch
        %492 = sbr.rel (%p490) target = $region44
      $region43: #{tpu_custom_call.1} parent=11 // pred_region
        _
      $region44: #{tpu_custom_call.1} parent=11 // pred_fallthru
        _
      // Predicated region
      $region45: #{tpu_custom_call.1} parent=11 // pred_check
        %p493 = pneg %p279
      $region46: #{tpu_custom_call.1} parent=11 // pred_check_branch
        %495 = sbr.rel (%p493) target = $region48
      $region47: #{tpu_custom_call.1} parent=11 // pred_region
        _
      $region48: #{tpu_custom_call.1} parent=11 // pred_fallthru
        _
      // Predicated region
      $region49: #{tpu_custom_call.1} parent=11 // pred_check
        %p496 = pneg %p300
      $region50: #{tpu_custom_call.1} parent=11 // pred_check_branch
        %498 = sbr.rel (%p496) target = $region52
      $region51: #{tpu_custom_call.1} parent=11 // pred_region
        _
      $region52: #{tpu_custom_call.1} parent=11 // pred_fallthru
        _
      // Predicated region
      $region53: #{tpu_custom_call.1} parent=11 // pred_check
        %p499 = pneg %p321
      $region54: #{tpu_custom_call.1} parent=11 // pred_check_branch
        %501 = sbr.rel (%p499) target = $region56
      $region55: #{tpu_custom_call.1} parent=11 // pred_region
        _
      $region56: #{tpu_custom_call.1} parent=11 // pred_fallthru
        _
      // Predicated region
      $region57: #{tpu_custom_call.1} parent=11 // pred_check
        %p502 = pneg %p342
      $region58: #{tpu_custom_call.1} parent=11 // pred_check_branch
        %504 = sbr.rel (%p502) target = $region60
      $region59: #{tpu_custom_call.1} parent=11 // pred_region
        _
      $region60: #{tpu_custom_call.1} parent=11 // pred_fallthru
        _
      // Predicated region
      $region61: #{tpu_custom_call.1} parent=11 // pred_check
        %p505 = pneg %p363
      $region62: #{tpu_custom_call.1} parent=11 // pred_check_branch
        %507 = sbr.rel (%p505) target = $region64
      $region63: #{tpu_custom_call.1} parent=11 // pred_region
        _
      $region64: #{tpu_custom_call.1} parent=11 // pred_fallthru
        _
      // Predicated region
      $region65: #{tpu_custom_call.1} parent=11 // pred_check
        %p508 = pneg %p384
      $region66: #{tpu_custom_call.1} parent=11 // pred_check_branch
        %510 = sbr.rel (%p508) target = $region68
      $region67: #{tpu_custom_call.1} parent=11 // pred_region
        _
      $region68: #{tpu_custom_call.1} parent=11 // pred_fallthru
        _
      // Predicated region
      $region69: #{tpu_custom_call.1} parent=11 // pred_check
        %p511 = pneg %p405
      $region70: #{tpu_custom_call.1} parent=11 // pred_check_branch
        %513 = sbr.rel (%p511) target = $region72
      $region71: #{tpu_custom_call.1} parent=11 // pred_region
        _
      $region72: #{tpu_custom_call.1} parent=11 // pred_fallthru
        _
      // Predicated region
      $region73: #{tpu_custom_call.1} parent=11 // pred_check
        %p514 = pneg %p426
      $region74: #{tpu_custom_call.1} parent=11 // pred_check_branch
        %516 = sbr.rel (%p514) target = $region76
      $region75: #{tpu_custom_call.1} parent=11 // pred_region
        _
      $region76: #{tpu_custom_call.1} parent=11 // pred_fallthru
        _
    $region12: #{tpu_custom_call.1} parent=5 // pred_fallthru
      _
    %p517 = scmp.lt.s32.totalorder %s24, 2
    // Predicated region
    $region77: #{tpu_custom_call.1} parent=5 // pred_check
      %p518 = pneg %p517
    $region78: #{tpu_custom_call.1} parent=5 // pred_check_branch
      %520 = sbr.rel (%p518) target = $region80
    $region79: #{tpu_custom_call.1} parent=5 // pred_region
      // Predicated region
      $region81: #{tpu_custom_call.1} parent=79 // pred_check
        %p521 = pneg %p58
      $region82: #{tpu_custom_call.1} parent=79 // pred_check_branch
        %523 = sbr.rel (%p521) target = $region84
      $region83: #{tpu_custom_call.1} parent=79 // pred_region
        %p524 = scmp.lt.s32.totalorder %s31, 1
        %s525 = scalar_select %p524, %s31, 1
        %p526 = scmp.lt.s32.totalorder %s32, 0
        %s527 = scalar_select %p526, %s32, 0
        %s528 = sadd.s32 %s527, %s525
        %s529 = smul.addr %s528, 8
        %s530 = scalar_lea.vmem %s0, %s529
      $region84: #{tpu_custom_call.1} parent=79 // pred_fallthru
        _
      // Predicated region
      $region85: #{tpu_custom_call.1} parent=79 // pred_check
        %p531 = pneg %p84
      $region86: #{tpu_custom_call.1} parent=79 // pred_check_branch
        %533 = sbr.rel (%p531) target = $region88
      $region87: #{tpu_custom_call.1} parent=79 // pred_region
        %p534 = scmp.lt.s32.totalorder %s31, 1
        %s535 = scalar_select %p534, %s31, 1
        %s536 = smul.addr %s535, 4
        %s537 = scalar_lea.vmem %s1, %s536
      $region88: #{tpu_custom_call.1} parent=79 // pred_fallthru
        _
    $region80: #{tpu_custom_call.1} parent=5 // pred_fallthru
      _
    %p538 = scmp.le.s32.totalorder 1, %s24
    %p539 = scmp.lt.s32.totalorder %s24, 3
    %p540 = pnand %p538, %p539
    %p541 = pneg %p540
    // Predicated region
    $region89: #{tpu_custom_call.1} parent=5 // pred_check
      _
    $region90: #{tpu_custom_call.1} parent=5 // pred_check_branch
      %543 = sbr.rel (%p540) target = $region92
    $region91: #{tpu_custom_call.1} parent=5 // pred_region
      %s544 = ssub.s32 %s24, 1
      %p545 = scmp.lt.s32.totalorder %s33, 1
      %s546 = scalar_select %p545, %s33, 1
      %p547 = scmp.lt.s32.totalorder %s34, 0
      %s548 = scalar_select %p547, %s34, 0
      %s549 = sadd.s32 %s548, %s546
      %s550 = smul.addr %s549, 8
      %s551 = scalar_lea.vmem %s0, %s550
      %p552 = pneg %p64
      %p553 = pneg %p61
      %p554 = scmp.lt.s32.totalorder %s33, 1
      %s555 = scalar_select %p554, %s33, 1
      %s556 = smul.addr %s555, 4
      %s557 = scalar_lea.vmem %s1, %s556
      %p558 = pneg %p90
      %p559 = pneg %p87
      %p560 = pneg %p111
      %p561 = pneg %p108
      %p562 = pneg %p132
      %p563 = pneg %p129
      %p564 = pneg %p153
      %p565 = pneg %p150
      %p566 = pneg %p174
      %p567 = pneg %p171
      %p568 = pneg %p195
      %p569 = pneg %p192
      %p570 = pneg %p216
      %p571 = pneg %p213
      %p572 = pneg %p237
      %p573 = pneg %p234
      %p574 = pneg %p258
      %p575 = pneg %p255
      %p576 = pneg %p279
      %p577 = pneg %p276
      %p578 = pneg %p300
      %p579 = pneg %p297
      %p580 = pneg %p321
      %p581 = pneg %p318
      %p582 = pneg %p342
      %p583 = pneg %p339
      %p584 = pneg %p363
      %p585 = pneg %p360
      %p586 = pneg %p384
      %p587 = pneg %p381
      %p588 = pneg %p405
      %p589 = pneg %p402
      %p590 = pneg %p426
      %p591 = pneg %p423
      %p592 = pneg %p454
      %p593 = pneg %p451
      %p594 = scmp.lt.s32.totalorder %s33, 1
      %s595 = scalar_select %p594, %s33, 1
      %p596 = scmp.lt.s32.totalorder %s34, 0
      %s597 = scalar_select %p596, %s34, 0
      %s598 = sadd.s32 %s597, %s595
      %s599 = smul.addr %s598, 8
      %s600 = scalar_lea.vmem %s18, %s599
      %p601 = scmp.lt.s32.totalorder %s33, 1
      %s602 = scalar_select %p601, %s33, 1
      %p603 = scmp.lt.s32.totalorder %s34, 0
      %s604 = scalar_select %p603, %s34, 0
      %s605 = sadd.s32 %s604, %s602
      %s606 = smul.addr %s605, 8
      %s607 = scalar_lea.vmem %s0, %s606
      %p608 = scmp.lt.s32.totalorder %s33, 1
      %s609 = scalar_select %p608, %s33, 1
      %s610 = smul.addr %s609, 4
      %s611 = scalar_lea.vmem %s1, %s610
      %p612 = scmp.lt.s32.totalorder %s33, 1
      %s613 = scalar_select %p612, %s33, 1
      %p614 = scmp.lt.s32.totalorder %s34, 0
      %s615 = scalar_select %p614, %s34, 0
      %s616 = sadd.s32 %s615, %s613
      %s617 = smul.addr %s616, 8
      %s618 = scalar_lea.vmem %s18, %s617
      %v620 = vld [vmem:[%s607] sm:$0xff]
      %p621 = scmp.eq.s32.totalorder %s34, 0
      // Predicated region
      $region93: #{tpu_custom_call.1} parent=91 // pred_check
        %p622 = pneg %p621
      $region94: #{tpu_custom_call.1} parent=91 // pred_check_branch
        %624 = sbr.rel (%p622) target = $region96
      $region95: #{tpu_custom_call.1} parent=91 // pred_region
        %v625 = vld [vmem:[%s611] sm:$0xf]
        %v626 = vld [vmem:[%s4] sm:$0x3]
        %v627 = vld [vmem:[%s4 + $0x2] sm:$0x3]
        %v628 = vld [vmem:[%s5] sm:$0x1]
        %v629 = vld [vmem:[%s5 + $0x1] sm:$0x1]
        %v632 = vlaneseq
        %v633 = vshrl.u32 %v632, 7
        %v634 = vsub.s32 0, %v633
        %v635 = vrot.slane %v628, %v634
        %v636 = vlaneseq
        %v637 = vshrl.u32 %v636, 7
        %v638 = vsub.s32 0, %v637
        %v639 = vrot.slane %v629, %v638
        %vm642 = vcmask 31744
        %v644 = vsel %vm642, %v625, 0
        %vm646 = vcmask 1041408
        %v648 = vsel %vm646, %v626, 0
        %650 = vmatprep.subr.bf16.mxu0 0
        %651 = vmatpush1.bf16.msra.mxu0 0
        %652 = vmatprep.subr.bf16.mxu0 0
        %653 = vmatpush1.bf16.msra.mxu0 0
        %654 = vmatprep.subr.bf16.mxu0 0
        %655 = vmatpush1.bf16.msra.mxu0 0
        %656 = vmatprep.subr.bf16.mxu0 0
        %657 = vmatpush1.bf16.msra.mxu0 0
        %658 = vmatprep.subr.bf16.mxu0 0
        %659 = vmatpush1.bf16.msra.mxu0 0
        %660 = vmatprep.subr.bf16.mxu0 0
        %661 = vmatpush1.bf16.msra.mxu0 0
        %662 = vmatprep.subr.bf16.mxu0 0
        %663 = vmatpush1.bf16.msra.mxu0 0
        %664 = vmatprep.subr.bf16.mxu0 0
        %665 = vmatpush1.bf16.msra.mxu0 %v648
        %666 = vmatprep.subr.bf16.mxu0 0
        %667 = vmatpush2.bf16.msra.mxu0 0
        %668 = vmatprep.subr.bf16.mxu0 0
        %669 = vmatpush2.bf16.msra.mxu0 0
        %670 = vmatprep.subr.bf16.mxu0 0
        %671 = vmatpush2.bf16.msra.mxu0 0
        %672 = vmatprep.subr.bf16.mxu0 0
        %673 = vmatpush2.bf16.msra.mxu0 0
        %674 = vmatprep.subr.bf16.mxu0 0
        %675 = vmatpush2.bf16.msra.mxu0 0
        %676 = vmatprep.subr.bf16.mxu0 0
        %677 = vmatpush2.bf16.msra.mxu0 0
        %678 = vmatprep.subr.bf16.mxu0 0
        %679 = vmatpush2.bf16.msra.mxu0 0
        %680 = vmatprep.subr.bf16.mxu0 0
        %681 = vmatpush2.bf16.msra.mxu0 0
        %682 = vmatprep.mubr.bf16.mxu0 0
        %683 = vmatmul.mubr.bf16.gmra.mxu0 %v644
        %v684 = vpop.f32.mrf.mxu0
        %v685 = vadd.f32 %v635, %v684
        %v686 = vpop.f32.mrf.mxu0
        %v687 = vpop.f32.mrf.mxu0
        %v688 = vpop.f32.mrf.mxu0
        %689 = vdwg.mxu0
        %v691 = vsel %vm646, %v627, 0
        %693 = vmatprep.subr.bf16.mxu0 0
        %694 = vmatpush1.bf16.msra.mxu0 0
        %695 = vmatprep.subr.bf16.mxu0 0
        %696 = vmatpush1.bf16.msra.mxu0 0
        %697 = vmatprep.subr.bf16.mxu0 0
        %698 = vmatpush1.bf16.msra.mxu0 0
        %699 = vmatprep.subr.bf16.mxu0 0
        %700 = vmatpush1.bf16.msra.mxu0 0
        %701 = vmatprep.subr.bf16.mxu0 0
        %702 = vmatpush1.bf16.msra.mxu0 0
        %703 = vmatprep.subr.bf16.mxu0 0
        %704 = vmatpush1.bf16.msra.mxu0 0
        %705 = vmatprep.subr.bf16.mxu0 0
        %706 = vmatpush1.bf16.msra.mxu0 0
        %707 = vmatprep.subr.bf16.mxu0 0
        %708 = vmatpush1.bf16.msra.mxu0 %v691
        %709 = vmatprep.subr.bf16.mxu0 0
        %710 = vmatpush2.bf16.msra.mxu0 0
        %711 = vmatprep.subr.bf16.mxu0 0
        %712 = vmatpush2.bf16.msra.mxu0 0
        %713 = vmatprep.subr.bf16.mxu0 0
        %714 = vmatpush2.bf16.msra.mxu0 0
        %715 = vmatprep.subr.bf16.mxu0 0
        %716 = vmatpush2.bf16.msra.mxu0 0
        %717 = vmatprep.subr.bf16.mxu0 0
        %718 = vmatpush2.bf16.msra.mxu0 0
        %719 = vmatprep.subr.bf16.mxu0 0
        %720 = vmatpush2.bf16.msra.mxu0 0
        %721 = vmatprep.subr.bf16.mxu0 0
        %722 = vmatpush2.bf16.msra.mxu0 0
        %723 = vmatprep.subr.bf16.mxu0 0
        %724 = vmatpush2.bf16.msra.mxu0 0
        %725 = vmatprep.mubr.bf16.mxu0 0
        %726 = vmatmul.mubr.bf16.gmra.mxu0 %v644
        %v727 = vpop.f32.mrf.mxu0
        %v728 = vadd.f32 %v639, %v727
        %v729 = vpop.f32.mrf.mxu0
        %v730 = vpop.f32.mrf.mxu0
        %v731 = vpop.f32.mrf.mxu0
        %732 = vdwg.mxu0
        %v733 = vld [vmem:[%s6] sm:$0x3]
        %v734 = vld [vmem:[%s6 + $0x2] sm:$0x3]
        %v735 = vld [vmem:[%s7] sm:$0x1]
        %v736 = vld [vmem:[%s7 + $0x1] sm:$0x1]
        %v739 = vlaneseq
        %v740 = vshrl.u32 %v739, 7
        %v741 = vsub.s32 0, %v740
        %v742 = vrot.slane %v735, %v741
        %v743 = vlaneseq
        %v744 = vshrl.u32 %v743, 7
        %v745 = vsub.s32 0, %v744
        %v746 = vrot.slane %v736, %v745
        %v750 = vsel %vm646, %v733, 0
        %752 = vmatprep.subr.bf16.mxu0 0
        %753 = vmatpush1.bf16.msra.mxu0 0
        %754 = vmatprep.subr.bf16.mxu0 0
        %755 = vmatpush1.bf16.msra.mxu0 0
        %756 = vmatprep.subr.bf16.mxu0 0
        %757 = vmatpush1.bf16.msra.mxu0 0
        %758 = vmatprep.subr.bf16.mxu0 0
        %759 = vmatpush1.bf16.msra.mxu0 0
        %760 = vmatprep.subr.bf16.mxu0 0
        %761 = vmatpush1.bf16.msra.mxu0 0
        %762 = vmatprep.subr.bf16.mxu0 0
        %763 = vmatpush1.bf16.msra.mxu0 0
        %764 = vmatprep.subr.bf16.mxu0 0
        %765 = vmatpush1.bf16.msra.mxu0 0
        %766 = vmatprep.subr.bf16.mxu0 0
        %767 = vmatpush1.bf16.msra.mxu0 %v750
        %768 = vmatprep.subr.bf16.mxu0 0
        %769 = vmatpush2.bf16.msra.mxu0 0
        %770 = vmatprep.subr.bf16.mxu0 0
        %771 = vmatpush2.bf16.msra.mxu0 0
        %772 = vmatprep.subr.bf16.mxu0 0
        %773 = vmatpush2.bf16.msra.mxu0 0
        %774 = vmatprep.subr.bf16.mxu0 0
        %775 = vmatpush2.bf16.msra.mxu0 0
        %776 = vmatprep.subr.bf16.mxu0 0
        %777 = vmatpush2.bf16.msra.mxu0 0
        %778 = vmatprep.subr.bf16.mxu0 0
        %779 = vmatpush2.bf16.msra.mxu0 0
        %780 = vmatprep.subr.bf16.mxu0 0
        %781 = vmatpush2.bf16.msra.mxu0 0
        %782 = vmatprep.subr.bf16.mxu0 0
        %783 = vmatpush2.bf16.msra.mxu0 0
        %784 = vmatprep.mubr.bf16.mxu0 0
        %785 = vmatmul.mubr.bf16.gmra.mxu0 %v644
        %v786 = vpop.f32.mrf.mxu0
        %v787 = vadd.f32 %v742, %v786
        %v788 = vpop.f32.mrf.mxu0
        %v789 = vpop.f32.mrf.mxu0
        %v790 = vpop.f32.mrf.mxu0
        %791 = vdwg.mxu0
        %v793 = vsel %vm646, %v734, 0
        %795 = vmatprep.subr.bf16.mxu0 0
        %796 = vmatpush1.bf16.msra.mxu0 0
        %797 = vmatprep.subr.bf16.mxu0 0
        %798 = vmatpush1.bf16.msra.mxu0 0
        %799 = vmatprep.subr.bf16.mxu0 0
        %800 = vmatpush1.bf16.msra.mxu0 0
        %801 = vmatprep.subr.bf16.mxu0 0
        %802 = vmatpush1.bf16.msra.mxu0 0
        %803 = vmatprep.subr.bf16.mxu0 0
        %804 = vmatpush1.bf16.msra.mxu0 0
        %805 = vmatprep.subr.bf16.mxu0 0
        %806 = vmatpush1.bf16.msra.mxu0 0
        %807 = vmatprep.subr.bf16.mxu0 0
        %808 = vmatpush1.bf16.msra.mxu0 0
        %809 = vmatprep.subr.bf16.mxu0 0
        %810 = vmatpush1.bf16.msra.mxu0 %v793
        %811 = vmatprep.subr.bf16.mxu0 0
        %812 = vmatpush2.bf16.msra.mxu0 0
        %813 = vmatprep.subr.bf16.mxu0 0
        %814 = vmatpush2.bf16.msra.mxu0 0
        %815 = vmatprep.subr.bf16.mxu0 0
        %816 = vmatpush2.bf16.msra.mxu0 0
        %817 = vmatprep.subr.bf16.mxu0 0
        %818 = vmatpush2.bf16.msra.mxu0 0
        %819 = vmatprep.subr.bf16.mxu0 0
        %820 = vmatpush2.bf16.msra.mxu0 0
        %821 = vmatprep.subr.bf16.mxu0 0
        %822 = vmatpush2.bf16.msra.mxu0 0
        %823 = vmatprep.subr.bf16.mxu0 0
        %824 = vmatpush2.bf16.msra.mxu0 0
        %825 = vmatprep.subr.bf16.mxu0 0
        %826 = vmatpush2.bf16.msra.mxu0 0
        %827 = vmatprep.mubr.bf16.mxu0 0
        %828 = vmatmul.mubr.bf16.gmra.mxu0 %v644
        %v829 = vpop.f32.mrf.mxu0
        %v830 = vadd.f32 %v746, %v829
        %v831 = vpop.f32.mrf.mxu0
        %v832 = vpop.f32.mrf.mxu0
        %v833 = vpop.f32.mrf.mxu0
        %834 = vdwg.mxu0
        %v835 = vpack.c.bf16 %v685, %v685
        %v836 = vpack.c.bf16 %v728, %v728
        %vm837 = vcmask 11264
        %838 = vst.msk [vmem:[#allocation2] sm:$0xf] %vm837, %v835
        %839 = vst.msk [vmem:[#allocation2 + $0x4] sm:$0xf] %vm837, %v836
        %v840 = vpack.c.bf16 %v787, %v787
        %v841 = vpack.c.bf16 %v830, %v830
        %842 = vst.msk [vmem:[#allocation3] sm:$0xf] %vm837, %v840
        %843 = vst.msk [vmem:[#allocation3 + $0x4] sm:$0xf] %vm837, %v841
      $region96: #{tpu_custom_call.1} parent=91 // pred_fallthru
        _
      %v844 = vpack.c.bf16 %v620, %v620
      %v845 = vld [vmem:[%s2] sm:$0x3]
      %v846 = vld [vmem:[%s2 + $0x2] sm:$0x3]
      %v847 = vld [vmem:[%s3] sm:$0x1]
      %v848 = vld [vmem:[%s3 + $0x1] sm:$0x1]
      %v851 = vlaneseq
      %v852 = vshrl.u32 %v851, 7
      %v853 = vsub.s32 0, %v852
      %v854 = vrot.slane %v847, %v853
      %v855 = vlaneseq
      %v856 = vshrl.u32 %v855, 7
      %v857 = vsub.s32 0, %v856
      %v858 = vrot.slane %v848, %v857
      %vm861 = vcmask 31744
      %v863 = vsel %vm861, %v844, 0
      %vm865 = vcmask 1041408
      %v867 = vsel %vm865, %v845, 0
      %869 = vmatprep.subr.bf16.mxu0 0
      %870 = vmatpush1.bf16.msra.mxu0 0
      %871 = vmatprep.subr.bf16.mxu0 0
      %872 = vmatpush1.bf16.msra.mxu0 0
      %873 = vmatprep.subr.bf16.mxu0 0
      %874 = vmatpush1.bf16.msra.mxu0 0
      %875 = vmatprep.subr.bf16.mxu0 0
      %876 = vmatpush1.bf16.msra.mxu0 0
      %877 = vmatprep.subr.bf16.mxu0 0
      %878 = vmatpush1.bf16.msra.mxu0 0
      %879 = vmatprep.subr.bf16.mxu0 0
      %880 = vmatpush1.bf16.msra.mxu0 0
      %881 = vmatprep.subr.bf16.mxu0 0
      %882 = vmatpush1.bf16.msra.mxu0 0
      %883 = vmatprep.subr.bf16.mxu0 0
      %884 = vmatpush1.bf16.msra.mxu0 %v867
      %885 = vmatprep.subr.bf16.mxu0 0
      %886 = vmatpush2.bf16.msra.mxu0 0
      %887 = vmatprep.subr.bf16.mxu0 0
      %888 = vmatpush2.bf16.msra.mxu0 0
      %889 = vmatprep.subr.bf16.mxu0 0
      %890 = vmatpush2.bf16.msra.mxu0 0
      %891 = vmatprep.subr.bf16.mxu0 0
      %892 = vmatpush2.bf16.msra.mxu0 0
      %893 = vmatprep.subr.bf16.mxu0 0
      %894 = vmatpush2.bf16.msra.mxu0 0
      %895 = vmatprep.subr.bf16.mxu0 0
      %896 = vmatpush2.bf16.msra.mxu0 0
      %897 = vmatprep.subr.bf16.mxu0 0
      %898 = vmatpush2.bf16.msra.mxu0 0
      %899 = vmatprep.subr.bf16.mxu0 0
      %900 = vmatpush2.bf16.msra.mxu0 0
      %901 = vmatprep.mubr.bf16.mxu0 0
      %902 = vmatmul.mubr.bf16.gmra.mxu0 %v863
      %v903 = vpop.f32.mrf.mxu0
      %v904 = vadd.f32 %v854, %v903
      %v905 = vpop.f32.mrf.mxu0
      %v906 = vpop.f32.mrf.mxu0
      %v907 = vpop.f32.mrf.mxu0
      %908 = vdwg.mxu0
      %v910 = vsel %vm865, %v846, 0
      %912 = vmatprep.subr.bf16.mxu0 0
      %913 = vmatpush1.bf16.msra.mxu0 0
      %914 = vmatprep.subr.bf16.mxu0 0
      %915 = vmatpush1.bf16.msra.mxu0 0
      %916 = vmatprep.subr.bf16.mxu0 0
      %917 = vmatpush1.bf16.msra.mxu0 0
      %918 = vmatprep.subr.bf16.mxu0 0
      %919 = vmatpush1.bf16.msra.mxu0 0
      %920 = vmatprep.subr.bf16.mxu0 0
      %921 = vmatpush1.bf16.msra.mxu0 0
      %922 = vmatprep.subr.bf16.mxu0 0
      %923 = vmatpush1.bf16.msra.mxu0 0
      %924 = vmatprep.subr.bf16.mxu0 0
      %925 = vmatpush1.bf16.msra.mxu0 0
      %926 = vmatprep.subr.bf16.mxu0 0
      %927 = vmatpush1.bf16.msra.mxu0 %v910
      %928 = vmatprep.subr.bf16.mxu0 0
      %929 = vmatpush2.bf16.msra.mxu0 0
      %930 = vmatprep.subr.bf16.mxu0 0
      %931 = vmatpush2.bf16.msra.mxu0 0
      %932 = vmatprep.subr.bf16.mxu0 0
      %933 = vmatpush2.bf16.msra.mxu0 0
      %934 = vmatprep.subr.bf16.mxu0 0
      %935 = vmatpush2.bf16.msra.mxu0 0
      %936 = vmatprep.subr.bf16.mxu0 0
      %937 = vmatpush2.bf16.msra.mxu0 0
      %938 = vmatprep.subr.bf16.mxu0 0
      %939 = vmatpush2.bf16.msra.mxu0 0
      %940 = vmatprep.subr.bf16.mxu0 0
      %941 = vmatpush2.bf16.msra.mxu0 0
      %942 = vmatprep.subr.bf16.mxu0 0
      %943 = vmatpush2.bf16.msra.mxu0 0
      %944 = vmatprep.mubr.bf16.mxu0 0
      %945 = vmatmul.mubr.bf16.gmra.mxu0 %v863
      %v946 = vpop.f32.mrf.mxu0
      %v947 = vadd.f32 %v858, %v946
      %v948 = vpop.f32.mrf.mxu0
      %v949 = vpop.f32.mrf.mxu0
      %v950 = vpop.f32.mrf.mxu0
      %951 = vdwg.mxu0
      %v952 = vpack.c.bf16 %v904, %v904
      %v953 = vpack.c.bf16 %v947, %v947
      %v954 = vld [vmem:[#allocation2] sm:$0xf]
      %v955 = vld [vmem:[#allocation2 + $0x4] sm:$0xf]
      %vm956 = vcmask 15360
      %v958 = vsel %vm956, %v952, 0
      %v961 = vsel %vm956, %v954, 0
      %963 = vmatprep.subr.bf16.mxu0 0
      %964 = vmatpush1.bf16.xpose.msra.mxu0 0
      %965 = vmatprep.subr.bf16.mxu0 0
      %966 = vmatpush1.bf16.xpose.msra.mxu0 0
      %967 = vmatprep.subr.bf16.mxu0 0
      %968 = vmatpush1.bf16.xpose.msra.mxu0 0
      %969 = vmatprep.subr.bf16.mxu0 0
      %970 = vmatpush1.bf16.xpose.msra.mxu0 0
      %971 = vmatprep.subr.bf16.mxu0 0
      %972 = vmatpush1.bf16.xpose.msra.mxu0 0
      %973 = vmatprep.subr.bf16.mxu0 0
      %974 = vmatpush1.bf16.xpose.msra.mxu0 0
      %975 = vmatprep.subr.bf16.mxu0 0
      %976 = vmatpush1.bf16.xpose.msra.mxu0 0
      %977 = vmatprep.subr.bf16.mxu0 0
      %978 = vmatpush1.bf16.xpose.msra.mxu0 %v961
      %979 = vmatprep.subr.bf16.mxu0 0
      %980 = vmatpush2.bf16.xpose.msra.mxu0 0
      %981 = vmatprep.subr.bf16.mxu0 0
      %982 = vmatpush2.bf16.xpose.msra.mxu0 0
      %983 = vmatprep.subr.bf16.mxu0 0
      %984 = vmatpush2.bf16.xpose.msra.mxu0 0
      %985 = vmatprep.subr.bf16.mxu0 0
      %986 = vmatpush2.bf16.xpose.msra.mxu0 0
      %987 = vmatprep.subr.bf16.mxu0 0
      %988 = vmatpush2.bf16.xpose.msra.mxu0 0
      %989 = vmatprep.subr.bf16.mxu0 0
      %990 = vmatpush2.bf16.xpose.msra.mxu0 0
      %991 = vmatprep.subr.bf16.mxu0 0
      %992 = vmatpush2.bf16.xpose.msra.mxu0 0
      %993 = vmatprep.subr.bf16.mxu0 0
      %994 = vmatpush2.bf16.xpose.msra.mxu0 0
      %995 = vmatprep.mubr.bf16.mxu0 0
      %996 = vmatmul.mubr.bf16.gmra.mxu0 %v958
      %v997 = vpop.f32.mrf.mxu0
      %v998 = vadd.f32 0.0, %v997
      %v999 = vpop.f32.mrf.mxu0
      %v1000 = vpop.f32.mrf.mxu0
      %v1001 = vpop.f32.mrf.mxu0
      %1002 = vdwg.mxu0
      %v1004 = vsel %vm956, %v953, 0
      %v1007 = vsel %vm956, %v955, 0
      %1009 = vmatprep.subr.bf16.mxu0 0
      %1010 = vmatpush1.bf16.xpose.msra.mxu0 0
      %1011 = vmatprep.subr.bf16.mxu0 0
      %1012 = vmatpush1.bf16.xpose.msra.mxu0 0
      %1013 = vmatprep.subr.bf16.mxu0 0
      %1014 = vmatpush1.bf16.xpose.msra.mxu0 0
      %1015 = vmatprep.subr.bf16.mxu0 0
      %1016 = vmatpush1.bf16.xpose.msra.mxu0 0
      %1017 = vmatprep.subr.bf16.mxu0 0
      %1018 = vmatpush1.bf16.xpose.msra.mxu0 0
      %1019 = vmatprep.subr.bf16.mxu0 0
      %1020 = vmatpush1.bf16.xpose.msra.mxu0 0
      %1021 = vmatprep.subr.bf16.mxu0 0
      %1022 = vmatpush1.bf16.xpose.msra.mxu0 0
      %1023 = vmatprep.subr.bf16.mxu0 0
      %1024 = vmatpush1.bf16.xpose.msra.mxu0 %v1007
      %1025 = vmatprep.subr.bf16.mxu0 0
      %1026 = vmatpush2.bf16.xpose.msra.mxu0 0
      %1027 = vmatprep.subr.bf16.mxu0 0
      %1028 = vmatpush2.bf16.xpose.msra.mxu0 0
      %1029 = vmatprep.subr.bf16.mxu0 0
      %1030 = vmatpush2.bf16.xpose.msra.mxu0 0
      %1031 = vmatprep.subr.bf16.mxu0 0
      %1032 = vmatpush2.bf16.xpose.msra.mxu0 0
      %1033 = vmatprep.subr.bf16.mxu0 0
      %1034 = vmatpush2.bf16.xpose.msra.mxu0 0
      %1035 = vmatprep.subr.bf16.mxu0 0
      %1036 = vmatpush2.bf16.xpose.msra.mxu0 0
      %1037 = vmatprep.subr.bf16.mxu0 0
      %1038 = vmatpush2.bf16.xpose.msra.mxu0 0
      %1039 = vmatprep.subr.bf16.mxu0 0
      %1040 = vmatpush2.bf16.xpose.msra.mxu0 0
      %1041 = vmatprep.mubr.bf16.mxu0 0
      %1042 = vmatmul.mubr.bf16.gmra.mxu0 %v1004
      %v1043 = vpop.f32.mrf.mxu0
      %v1044 = vadd.f32 0.0, %v1043
      %v1045 = vpop.f32.mrf.mxu0
      %v1046 = vpop.f32.mrf.mxu0
      %v1047 = vpop.f32.mrf.mxu0
      %1048 = vdwg.mxu0
      %vm1049 = vcmask 64512
      %v1050 = vsel %vm1049, %v998, -inf
      %1051 = vmax.xlane.f32.xlu0 %v1050
      %v1052 = vpop.xlane.xlu0 %1051
      %v1053 = vsel %vm1049, %v1044, -inf
      %1054 = vmax.xlane.f32.xlu0 %v1053
      %v1055 = vpop.xlane.xlu0 %1054
      %v1056 = vsub.f32 %v998, %v1052
      %v1057 = vsub.f32 %v1044, %v1055
      %v1058 = vmul.f32 %v1056, 1.442695
      %v1059 = vpow.pop %v1058
      %v1060 = vmul.f32 %v1057, 1.442695
      %v1061 = vpow.pop %v1060
      %v1062 = vsel %vm1049, %v1059, 0.0
      %1063 = vadd.xlane.f32.xlu0 %v1062
      %v1064 = vpop.xlane.xlu0 %1063
      %v1065 = vsel %vm1049, %v1061, 0.0
      %1066 = vadd.xlane.f32.xlu0 %v1065
      %v1067 = vpop.xlane.xlu0 %1066
      %v1068 = vrcp.pop %v1064
      %v1069 = vrcp.pop %v1067
      %v1070 = vmul.f32 %v1059, %v1068
      %v1071 = vmul.f32 %v1061, %v1069
      %v1072 = vpack.c.bf16 %v1070, %v1070
      %v1073 = vpack.c.bf16 %v1071, %v1071
      %v1074 = vld [vmem:[#allocation3] sm:$0xf]
      %v1075 = vld [vmem:[#allocation3 + $0x4] sm:$0xf]
      %v1077 = vsel %vm1049, %v1072, 0
      %vm1079 = vcmask 1043456
      %v1081 = vsel %vm1079, %v1074, 0
      %1083 = vmatprep.subr.bf16.mxu0 0
      %1084 = vmatpush1.bf16.msra.mxu0 0
      %1085 = vmatprep.subr.bf16.mxu0 0
      %1086 = vmatpush1.bf16.msra.mxu0 0
      %1087 = vmatprep.subr.bf16.mxu0 0
      %1088 = vmatpush1.bf16.msra.mxu0 0
      %1089 = vmatprep.subr.bf16.mxu0 0
      %1090 = vmatpush1.bf16.msra.mxu0 0
      %1091 = vmatprep.subr.bf16.mxu0 0
      %1092 = vmatpush1.bf16.msra.mxu0 0
      %1093 = vmatprep.subr.bf16.mxu0 0
      %1094 = vmatpush1.bf16.msra.mxu0 0
      %1095 = vmatprep.subr.bf16.mxu0 0
      %1096 = vmatpush1.bf16.msra.mxu0 0
      %1097 = vmatprep.subr.bf16.mxu0 0
      %1098 = vmatpush1.bf16.msra.mxu0 %v1081
      %1099 = vmatprep.subr.bf16.mxu0 0
      %1100 = vmatpush2.bf16.msra.mxu0 0
      %1101 = vmatprep.subr.bf16.mxu0 0
      %1102 = vmatpush2.bf16.msra.mxu0 0
      %1103 = vmatprep.subr.bf16.mxu0 0
      %1104 = vmatpush2.bf16.msra.mxu0 0
      %1105 = vmatprep.subr.bf16.mxu0 0
      %1106 = vmatpush2.bf16.msra.mxu0 0
      %1107 = vmatprep.subr.bf16.mxu0 0
      %1108 = vmatpush2.bf16.msra.mxu0 0
      %1109 = vmatprep.subr.bf16.mxu0 0
      %1110 = vmatpush2.bf16.msra.mxu0 0
      %1111 = vmatprep.subr.bf16.mxu0 0
      %1112 = vmatpush2.bf16.msra.mxu0 0
      %1113 = vmatprep.subr.bf16.mxu0 0
      %1114 = vmatpush2.bf16.msra.mxu0 0
      %1115 = vmatprep.mubr.bf16.mxu0 0
      %1116 = vmatmul.mubr.bf16.gmra.mxu0 %v1077
      %v1117 = vpop.f32.mrf.mxu0
      %v1118 = vadd.f32 0.0, %v1117
      %v1119 = vpop.f32.mrf.mxu0
      %v1120 = vpop.f32.mrf.mxu0
      %v1121 = vpop.f32.mrf.mxu0
      %1122 = vdwg.mxu0
      %v1124 = vsel %vm1049, %v1073, 0
      %v1127 = vsel %vm1079, %v1075, 0
      %1129 = vmatprep.subr.bf16.mxu0 0
      %1130 = vmatpush1.bf16.msra.mxu0 0
      %1131 = vmatprep.subr.bf16.mxu0 0
      %1132 = vmatpush1.bf16.msra.mxu0 0
      %1133 = vmatprep.subr.bf16.mxu0 0
      %1134 = vmatpush1.bf16.msra.mxu0 0
      %1135 = vmatprep.subr.bf16.mxu0 0
      %1136 = vmatpush1.bf16.msra.mxu0 0
      %1137 = vmatprep.subr.bf16.mxu0 0
      %1138 = vmatpush1.bf16.msra.mxu0 0
      %1139 = vmatprep.subr.bf16.mxu0 0
      %1140 = vmatpush1.bf16.msra.mxu0 0
      %1141 = vmatprep.subr.bf16.mxu0 0
      %1142 = vmatpush1.bf16.msra.mxu0 0
      %1143 = vmatprep.subr.bf16.mxu0 0
      %1144 = vmatpush1.bf16.msra.mxu0 %v1127
      %1145 = vmatprep.subr.bf16.mxu0 0
      %1146 = vmatpush2.bf16.msra.mxu0 0
      %1147 = vmatprep.subr.bf16.mxu0 0
      %1148 = vmatpush2.bf16.msra.mxu0 0
      %1149 = vmatprep.subr.bf16.mxu0 0
      %1150 = vmatpush2.bf16.msra.mxu0 0
      %1151 = vmatprep.subr.bf16.mxu0 0
      %1152 = vmatpush2.bf16.msra.mxu0 0
      %1153 = vmatprep.subr.bf16.mxu0 0
      %1154 = vmatpush2.bf16.msra.mxu0 0
      %1155 = vmatprep.subr.bf16.mxu0 0
      %1156 = vmatpush2.bf16.msra.mxu0 0
      %1157 = vmatprep.subr.bf16.mxu0 0
      %1158 = vmatpush2.bf16.msra.mxu0 0
      %1159 = vmatprep.subr.bf16.mxu0 0
      %1160 = vmatpush2.bf16.msra.mxu0 0
      %1161 = vmatprep.mubr.bf16.mxu0 0
      %1162 = vmatmul.mubr.bf16.gmra.mxu0 %v1124
      %v1163 = vpop.f32.mrf.mxu0
      %v1164 = vadd.f32 0.0, %v1163
      %v1165 = vpop.f32.mrf.mxu0
      %v1166 = vpop.f32.mrf.mxu0
      %v1167 = vpop.f32.mrf.mxu0
      %1168 = vdwg.mxu0
      %v1169 = vpack.c.bf16 %v1118, %v1118
      %v1170 = vpack.c.bf16 %v1164, %v1164
      %v1171 = vld [vmem:[%s8] sm:$0x1]
      %v1172 = vld [vmem:[%s8 + $0x1] sm:$0x1]
      %v1174 = vsel %vm956, %v1169, 0
      %vm1176 = vcmask 1040384
      %v1178 = vsel %vm1176, %v1171, 0
      %1180 = vmatprep.subr.bf16.mxu0 0
      %1181 = vmatpush1.bf16.msra.mxu0 0
      %1182 = vmatprep.subr.bf16.mxu0 0
      %1183 = vmatpush1.bf16.msra.mxu0 0
      %1184 = vmatprep.subr.bf16.mxu0 0
      %1185 = vmatpush1.bf16.msra.mxu0 0
      %1186 = vmatprep.subr.bf16.mxu0 0
      %1187 = vmatpush1.bf16.msra.mxu0 0
      %1188 = vmatprep.subr.bf16.mxu0 0
      %1189 = vmatpush1.bf16.msra.mxu0 0
      %1190 = vmatprep.subr.bf16.mxu0 0
      %1191 = vmatpush1.bf16.msra.mxu0 0
      %1192 = vmatprep.subr.bf16.mxu0 0
      %1193 = vmatpush1.bf16.msra.mxu0 0
      %1194 = vmatprep.subr.bf16.mxu0 0
      %1195 = vmatpush1.bf16.msra.mxu0 %v1178
      %1196 = vmatprep.subr.bf16.mxu0 0
      %1197 = vmatpush2.bf16.msra.mxu0 0
      %1198 = vmatprep.subr.bf16.mxu0 0
      %1199 = vmatpush2.bf16.msra.mxu0 0
      %1200 = vmatprep.subr.bf16.mxu0 0
      %1201 = vmatpush2.bf16.msra.mxu0 0
      %1202 = vmatprep.subr.bf16.mxu0 0
      %1203 = vmatpush2.bf16.msra.mxu0 0
      %1204 = vmatprep.subr.bf16.mxu0 0
      %1205 = vmatpush2.bf16.msra.mxu0 0
      %1206 = vmatprep.subr.bf16.mxu0 0
      %1207 = vmatpush2.bf16.msra.mxu0 0
      %1208 = vmatprep.subr.bf16.mxu0 0
      %1209 = vmatpush2.bf16.msra.mxu0 0
      %1210 = vmatprep.subr.bf16.mxu0 0
      %1211 = vmatpush2.bf16.msra.mxu0 0
      %1212 = vmatprep.mubr.bf16.mxu0 0
      %1213 = vmatmul.mubr.bf16.gmra.mxu0 %v1174
      %v1214 = vpop.f32.mrf.mxu0
      %v1215 = vadd.f32 0.0, %v1214
      %v1216 = vpop.f32.mrf.mxu0
      %v1217 = vpop.f32.mrf.mxu0
      %v1218 = vpop.f32.mrf.mxu0
      %1219 = vdwg.mxu0
      %v1221 = vsel %vm956, %v1170, 0
      %v1224 = vsel %vm1176, %v1172, 0
      %1226 = vmatprep.subr.bf16.mxu0 0
      %1227 = vmatpush1.bf16.msra.mxu0 0
      %1228 = vmatprep.subr.bf16.mxu0 0
      %1229 = vmatpush1.bf16.msra.mxu0 0
      %1230 = vmatprep.subr.bf16.mxu0 0
      %1231 = vmatpush1.bf16.msra.mxu0 0
      %1232 = vmatprep.subr.bf16.mxu0 0
      %1233 = vmatpush1.bf16.msra.mxu0 0
      %1234 = vmatprep.subr.bf16.mxu0 0
      %1235 = vmatpush1.bf16.msra.mxu0 0
      %1236 = vmatprep.subr.bf16.mxu0 0
      %1237 = vmatpush1.bf16.msra.mxu0 0
      %1238 = vmatprep.subr.bf16.mxu0 0
      %1239 = vmatpush1.bf16.msra.mxu0 0
      %1240 = vmatprep.subr.bf16.mxu0 0
      %1241 = vmatpush1.bf16.msra.mxu0 %v1224
      %1242 = vmatprep.subr.bf16.mxu0 0
      %1243 = vmatpush2.bf16.msra.mxu0 0
      %1244 = vmatprep.subr.bf16.mxu0 0
      %1245 = vmatpush2.bf16.msra.mxu0 0
      %1246 = vmatprep.subr.bf16.mxu0 0
      %1247 = vmatpush2.bf16.msra.mxu0 0
      %1248 = vmatprep.subr.bf16.mxu0 0
      %1249 = vmatpush2.bf16.msra.mxu0 0
      %1250 = vmatprep.subr.bf16.mxu0 0
      %1251 = vmatpush2.bf16.msra.mxu0 0
      %1252 = vmatprep.subr.bf16.mxu0 0
      %1253 = vmatpush2.bf16.msra.mxu0 0
      %1254 = vmatprep.subr.bf16.mxu0 0
      %1255 = vmatpush2.bf16.msra.mxu0 0
      %1256 = vmatprep.subr.bf16.mxu0 0
      %1257 = vmatpush2.bf16.msra.mxu0 0
      %1258 = vmatprep.mubr.bf16.mxu0 0
      %1259 = vmatmul.mubr.bf16.gmra.mxu0 %v1221
      %v1260 = vpop.f32.mrf.mxu0
      %v1261 = vadd.f32 0.0, %v1260
      %v1262 = vpop.f32.mrf.mxu0
      %v1263 = vpop.f32.mrf.mxu0
      %v1264 = vpop.f32.mrf.mxu0
      %1265 = vdwg.mxu0
      %v1266 = vsel %vm861, %v1215, 0.0
      %v1267 = vsel %vm861, %v1261, 0.0
      %v1268 = vadd.f32 %v1266, %v1267
      %v1269 = vld [vmem:[%s9] sm:$0x1]
      %v1271 = vlaneseq
      %v1272 = vshrl.u32 %v1271, 7
      %v1273 = vsub.s32 0, %v1272
      %v1274 = vrot.slane %v1269, %v1273
      %v1276 = vadd.f32 %v1268, %v1274
      %v1277 = vadd.f32 %v620, %v1276
      %v1278 = vld [vmem:[%s10] sm:$0x1]
      %v1279 = vld [vmem:[%s11] sm:$0x1]
      %v1280 = vsel %vm861, %v1277, 0.0
      %1281 = vadd.xlane.f32.xlu0 %v1280
      %v1282 = vpop.xlane.xlu0 %1281
      %v1283 = vrcp.pop 4.0
      %v1284 = vmul.f32 %v1282, %v1283
      %v1285 = vsub.f32 %v1277, %v1284
      %v1286 = vmul.f32 %v1285, %v1285
      %v1287 = vsel %vm861, %v1286, 0.0
      %1288 = vadd.xlane.f32.xlu0 %v1287
      %v1289 = vpop.xlane.xlu0 %1288
      %v1290 = vmul.f32 %v1289, %v1283
      %v1291 = vadd.f32 %v1290, 1e-05
      %v1292 = vrsqrt.pop %v1291
      %v1293 = vmul.f32 %v1285, %v1292
      %v1295 = vlaneseq
      %v1296 = vshrl.u32 %v1295, 7
      %v1297 = vsub.s32 0, %v1296
      %v1298 = vrot.slane %v1278, %v1297
      %v1300 = vmul.f32 %v1293, %v1298
      %v1302 = vlaneseq
      %v1303 = vshrl.u32 %v1302, 7
      %v1304 = vsub.s32 0, %v1303
      %v1305 = vrot.slane %v1279, %v1304
      %v1307 = vadd.f32 %v1300, %v1305
      %v1308 = vpack.c.bf16 %v1307, %v1307
      %v1309 = vld [vmem:[%s12] sm:$0x3]
      %v1310 = vld [vmem:[%s13] sm:$0x1]
      %v1312 = vlaneseq
      %v1313 = vshrl.u32 %v1312, 7
      %v1314 = vsub.s32 0, %v1313
      %v1315 = vrot.slane %v1310, %v1314
      %v1318 = vsel %vm861, %v1308, 0
      %v1321 = vsel %vm865, %v1309, 0
      %1323 = vmatprep.subr.bf16.mxu0 0
      %1324 = vmatpush1.bf16.msra.mxu0 0
      %1325 = vmatprep.subr.bf16.mxu0 0
      %1326 = vmatpush1.bf16.msra.mxu0 0
      %1327 = vmatprep.subr.bf16.mxu0 0
      %1328 = vmatpush1.bf16.msra.mxu0 0
      %1329 = vmatprep.subr.bf16.mxu0 0
      %1330 = vmatpush1.bf16.msra.mxu0 0
      %1331 = vmatprep.subr.bf16.mxu0 0
      %1332 = vmatpush1.bf16.msra.mxu0 0
      %1333 = vmatprep.subr.bf16.mxu0 0
      %1334 = vmatpush1.bf16.msra.mxu0 0
      %1335 = vmatprep.subr.bf16.mxu0 0
      %1336 = vmatpush1.bf16.msra.mxu0 0
      %1337 = vmatprep.subr.bf16.mxu0 0
      %1338 = vmatpush1.bf16.msra.mxu0 %v1321
      %1339 = vmatprep.subr.bf16.mxu0 0
      %1340 = vmatpush2.bf16.msra.mxu0 0
      %1341 = vmatprep.subr.bf16.mxu0 0
      %1342 = vmatpush2.bf16.msra.mxu0 0
      %1343 = vmatprep.subr.bf16.mxu0 0
      %1344 = vmatpush2.bf16.msra.mxu0 0
      %1345 = vmatprep.subr.bf16.mxu0 0
      %1346 = vmatpush2.bf16.msra.mxu0 0
      %1347 = vmatprep.subr.bf16.mxu0 0
      %1348 = vmatpush2.bf16.msra.mxu0 0
      %1349 = vmatprep.subr.bf16.mxu0 0
      %1350 = vmatpush2.bf16.msra.mxu0 0
      %1351 = vmatprep.subr.bf16.mxu0 0
      %1352 = vmatpush2.bf16.msra.mxu0 0
      %1353 = vmatprep.subr.bf16.mxu0 0
      %1354 = vmatpush2.bf16.msra.mxu0 0
      %1355 = vmatprep.mubr.bf16.mxu0 0
      %1356 = vmatmul.mubr.bf16.gmra.mxu0 %v1318
      %v1357 = vpop.f32.mrf.mxu0
      %v1358 = vadd.f32 %v1315, %v1357
      %v1359 = vpop.f32.mrf.mxu0
      %v1360 = vpop.f32.mrf.mxu0
      %v1361 = vpop.f32.mrf.mxu0
      %1362 = vdwg.mxu0
      %v1363 = vmax.f32 %v1358, 0.0
      %v1364 = vpack.c.bf16 %v1363, %v1363
      %v1365 = vld [vmem:[%s14] sm:$0x3]
      %v1366 = vld [vmem:[%s15] sm:$0x1]
      %v1368 = vlaneseq
      %v1369 = vshrl.u32 %v1368, 7
      %v1370 = vsub.s32 0, %v1369
      %v1371 = vrot.slane %v1366, %v1370
      %v1374 = vsel %vm861, %v1364, 0
      %v1377 = vsel %vm865, %v1365, 0
      %1379 = vmatprep.subr.bf16.mxu0 0
      %1380 = vmatpush1.bf16.msra.mxu0 0
      %1381 = vmatprep.subr.bf16.mxu0 0
      %1382 = vmatpush1.bf16.msra.mxu0 0
      %1383 = vmatprep.subr.bf16.mxu0 0
      %1384 = vmatpush1.bf16.msra.mxu0 0
      %1385 = vmatprep.subr.bf16.mxu0 0
      %1386 = vmatpush1.bf16.msra.mxu0 0
      %1387 = vmatprep.subr.bf16.mxu0 0
      %1388 = vmatpush1.bf16.msra.mxu0 0
      %1389 = vmatprep.subr.bf16.mxu0 0
      %1390 = vmatpush1.bf16.msra.mxu0 0
      %1391 = vmatprep.subr.bf16.mxu0 0
      %1392 = vmatpush1.bf16.msra.mxu0 0
      %1393 = vmatprep.subr.bf16.mxu0 0
      %1394 = vmatpush1.bf16.msra.mxu0 %v1377
      %1395 = vmatprep.subr.bf16.mxu0 0
      %1396 = vmatpush2.bf16.msra.mxu0 0
      %1397 = vmatprep.subr.bf16.mxu0 0
      %1398 = vmatpush2.bf16.msra.mxu0 0
      %1399 = vmatprep.subr.bf16.mxu0 0
      %1400 = vmatpush2.bf16.msra.mxu0 0
      %1401 = vmatprep.subr.bf16.mxu0 0
      %1402 = vmatpush2.bf16.msra.mxu0 0
      %1403 = vmatprep.subr.bf16.mxu0 0
      %1404 = vmatpush2.bf16.msra.mxu0 0
      %1405 = vmatprep.subr.bf16.mxu0 0
      %1406 = vmatpush2.bf16.msra.mxu0 0
      %1407 = vmatprep.subr.bf16.mxu0 0
      %1408 = vmatpush2.bf16.msra.mxu0 0
      %1409 = vmatprep.subr.bf16.mxu0 0
      %1410 = vmatpush2.bf16.msra.mxu0 0
      %1411 = vmatprep.mubr.bf16.mxu0 0
      %1412 = vmatmul.mubr.bf16.gmra.mxu0 %v1374
      %v1413 = vpop.f32.mrf.mxu0
      %v1414 = vadd.f32 %v1371, %v1413
      %v1415 = vpop.f32.mrf.mxu0
      %v1416 = vpop.f32.mrf.mxu0
      %v1417 = vpop.f32.mrf.mxu0
      %1418 = vdwg.mxu0
      %v1419 = vadd.f32 %v1307, %v1414
      %v1420 = vld [vmem:[%s16] sm:$0x1]
      %v1421 = vld [vmem:[%s17] sm:$0x1]
      %v1422 = vsel %vm861, %v1419, 0.0
      %1423 = vadd.xlane.f32.xlu0 %v1422
      %v1424 = vpop.xlane.xlu0 %1423
      %v1425 = vmul.f32 %v1424, %v1283
      %v1426 = vsub.f32 %v1419, %v1425
      %v1427 = vmul.f32 %v1426, %v1426
      %v1428 = vsel %vm861, %v1427, 0.0
      %1429 = vadd.xlane.f32.xlu0 %v1428
      %v1430 = vpop.xlane.xlu0 %1429
      %v1431 = vmul.f32 %v1430, %v1283
      %v1432 = vadd.f32 %v1431, 1e-05
      %v1433 = vrsqrt.pop %v1432
      %v1434 = vmul.f32 %v1426, %v1433
      %v1436 = vlaneseq
      %v1437 = vshrl.u32 %v1436, 7
      %v1438 = vsub.s32 0, %v1437
      %v1439 = vrot.slane %v1420, %v1438
      %v1441 = vmul.f32 %v1434, %v1439
      %v1443 = vlaneseq
      %v1444 = vshrl.u32 %v1443, 7
      %v1445 = vsub.s32 0, %v1444
      %v1446 = vrot.slane %v1421, %v1445
      %v1448 = vadd.f32 %v1441, %v1446
      %1449 = vst.msk [vmem:[%s618] sm:$0xff] %vm861, %v1448
      %p1450 = scmp.lt.s32.totalorder %s33, 1
      %s1451 = scalar_select %p1450, %s33, 1
      %p1452 = scmp.lt.s32.totalorder %s34, 0
      %s1453 = scalar_select %p1452, %s34, 0
      %s1454 = sadd.s32 %s1453, %s1451
      %s1455 = smul.addr %s1454, 8
      %s1456 = scalar_lea.vmem %s18, %s1455
      // Predicated region
      $region97: #{tpu_custom_call.1} parent=91 // pred_check
        %p1457 = pneg %p451
      $region98: #{tpu_custom_call.1} parent=91 // pred_check_branch
        %1459 = sbr.rel (%p1457) target = $region100
      $region99: #{tpu_custom_call.1} parent=91 // pred_region
        _
      $region100: #{tpu_custom_call.1} parent=91 // pred_fallthru
        _
    $region92: #{tpu_custom_call.1} parent=5 // pred_fallthru
      _
    %p1460 = scmp.le.s32.totalorder 2, %s24
    // Predicated region
    $region101: #{tpu_custom_call.1} parent=5 // pred_check
      %p1461 = pneg %p1460
    $region102: #{tpu_custom_call.1} parent=5 // pred_check_branch
      %1463 = sbr.rel (%p1461) target = $region104
    $region103: #{tpu_custom_call.1} parent=5 // pred_region
      %s1464 = ssub.s32 %s24, 2
      // Predicated region
      $region105: #{tpu_custom_call.1} parent=103 // pred_check
        %p1465 = pneg %p457
      $region106: #{tpu_custom_call.1} parent=103 // pred_check_branch
        %1467 = sbr.rel (%p1465) target = $region108
      $region107: #{tpu_custom_call.1} parent=103 // pred_region
        %p1468 = scmp.lt.s32.totalorder %s35, 1
        %s1469 = scalar_select %p1468, %s35, 1
        %p1470 = scmp.lt.s32.totalorder %s36, 0
        %s1471 = scalar_select %p1470, %s36, 0
        %s1472 = sadd.s32 %s1471, %s1469
        %s1473 = smul.addr %s1472, 8
        %s1474 = scalar_lea.vmem %s18, %s1473
      $region108: #{tpu_custom_call.1} parent=103 // pred_fallthru
        _
    $region104: #{tpu_custom_call.1} parent=5 // pred_fallthru
      _
  $region6: #{tpu_custom_call.1} parent=0 // loop_footer
    %s28 = sadd.s32 1, %s24
  $region7: #{tpu_custom_call.1} parent=0 // loop_footer_branch
    %23 = sbr.rel target = $region3
  $region8: #{tpu_custom_call.1} parent=0 // loop_exit
    _

</llo_original>
